<compile_context>
chip_gen: v7x
topology: tpu7x:2x2x1
jax: 0.10.0
libtpu: 0.0.40
codegen_flags: <defaults>
</compile_context>

<pallas_src>
import functools

import jax
import jax.numpy as jnp
from jax.experimental import pallas as pl
from jax.experimental.pallas import tpu as pltpu

EPS = 1e-5

# MXU operand dtype.  f32 keeps the kernel bit-comparable to the f32 reference
# (tight 1e-3 assert below); at this tiny config the kernel is overhead/DMA
# bound, so bf16 buys nothing.  At real Bottleneck widths switch this to
# jnp.bfloat16 (on v5e cast only at the dots -- no bf16 VALU there -- keep BN
# stats / accumulation in f32 via preferred_element_type) and loosen tolerance.
MATMUL_DTYPE = jnp.float32


def _bn_relu(y, g_ref, b_ref):
    """Training-mode BatchNorm + ReLU on y: (C, L), channels in rows.

    Single-pass statistics over the lane axis, affine folded into one
    scale/shift so per-element work is a single FMA + max; rsqrt runs on the
    EUP (free slot next to the VPU).
    """
    cnt = jnp.float32(y.shape[1])
    s1 = jnp.sum(y, axis=1, keepdims=True)
    s2 = jnp.sum(y * y, axis=1, keepdims=True)
    mean = s1 / cnt
    var = s2 / cnt - mean * mean
    scale = g_ref[...] * jax.lax.rsqrt(var + EPS)   # (C, 1)
    shift = b_ref[...] - mean * scale               # (C, 1)
    return jnp.maximum(y * scale + shift, 0.0)


def bottleneck_kernel(x_ref, hidx_ref, widx_ref,
                      w1_ref, g1_ref, b1_ref,
                      w2_ref, g2_ref, b2_ref,
                      w3_ref, g3_ref, b3_ref,
                      out_ref, im2col_ref, *, H, W):
    F = w1_ref.shape[0]                             # conv1 output channels
    L = x_ref.shape[1]                              # N * H * W (lane axis)

    # --- conv1: 1x1 conv == (F, Cin) @ (Cin, L) on the MXU --------------------
    y1 = jnp.dot(w1_ref[...].astype(MATMUL_DTYPE),
                 x_ref[...].astype(MATMUL_DTYPE),
                 preferred_element_type=jnp.float32)
    y1 = _bn_relu(y1, g1_ref, b1_ref).astype(MATMUL_DTYPE)

    # --- conv2: 3x3, stride 1, pad 1 as ONE (F, 9F) @ (9F, L) matmul ----------
    # Separable edge masks, hoisted out of the tap loop (4 non-trivial (1, L)
    # float masks total).  Taps are lane-rotations of y1 (XLU), masked with one
    # broadcast multiply, and streamed into the VMEM im2col scratch.
    h = hidx_ref[...]                               # (1, L) int32 row-in-image
    w = widx_ref[...]                               # (1, L) int32 col-in-image
    row_m = {-1: jnp.where(h >= 1, 1.0, 0.0).astype(MATMUL_DTYPE),
              0: None,
              1: jnp.where(h < H - 1, 1.0, 0.0).astype(MATMUL_DTYPE)}
    col_m = {-1: jnp.where(w >= 1, 1.0, 0.0).astype(MATMUL_DTYPE),
              0: None,
              1: jnp.where(w < W - 1, 1.0, 0.0).astype(MATMUL_DTYPE)}

    tap = 0
    for dy in (-1, 0, 1):
        for dx in (-1, 0, 1):
            off = dy * W + dx
            # pltpu.roll == jnp.roll: shifted[i, j] = y1[i, (j + off) % L]
            shifted = y1 if off == 0 else pltpu.roll(y1, (-off) % L, axis=1)
            rm, cm = row_m[dy], col_m[dx]
            if rm is not None and cm is not None:
                mask = rm * cm                      # (1, L)
            else:
                mask = rm if rm is not None else cm
            if mask is not None:
                shifted = shifted * mask            # (F, L) * (1, L) broadcast
            im2col_ref[pl.ds(tap * F, F), :] = shifted
            tap += 1

    y2 = jnp.dot(w2_ref[...].astype(MATMUL_DTYPE), im2col_ref[...],
                 preferred_element_type=jnp.float32)
    y2 = _bn_relu(y2, g2_ref, b2_ref)

    # --- conv3: 1x1 conv == (Cout, F) @ (F, L) --------------------------------
    y3 = jnp.dot(w3_ref[...].astype(MATMUL_DTYPE),
                 y2.astype(MATMUL_DTYPE),
                 preferred_element_type=jnp.float32)
    y3 = _bn_relu(y3, g3_ref, b3_ref)

    out_ref[...] = y3                               # (Cout, L): lane-dense store


def bottleneck_forward(x_nchw, params):
    """x_nchw: (N, Cin, H, W) float32. Returns (N, Cout, H, W) float32."""
    w1, g1, b1, w2, g2, b2, w3, g3, b3 = params
    N, Cin, H, W = x_nchw.shape
    F = w1.shape[1]
    Cout = w3.shape[1]
    L = N * H * W

    # Channels-major views.  In a full network, keep activations in (C, N*H*W)
    # between layers instead of paying these transposes per block.
    x_cm = jnp.transpose(x_nchw, (1, 0, 2, 3)).reshape(Cin, L)
    w1t = jnp.transpose(w1)                          # (F, Cin)
    w3t = jnp.transpose(w3)                          # (Cout, F)
    # (F_out, 9*F_in) weight for the fused 3x3 matmul, tap-major to match the
    # kernel's im2col row blocks.
    w2f = jnp.transpose(w2, (3, 0, 1, 2)).reshape(F, 9 * F)

    # Precomputed per-lane (h, w) indices for the conv2 edge masks.
    flat = jnp.arange(L, dtype=jnp.int32)
    w_idx = (flat % W).reshape(1, L)
    h_idx = ((flat // W) % H).reshape(1, L)

    vmem = pl.BlockSpec(memory_space=pltpu.MemorySpace.VMEM)
    kernel = functools.partial(bottleneck_kernel, H=H, W=W)

    # Gridless: the whole problem (incl. the 9F x L im2col scratch) is well
    # under 1 MiB of VMEM at these sizes; see TODOs above for the scaled path.
    out_cm = pl.pallas_call(
        kernel,
        out_shape=jax.ShapeDtypeStruct((Cout, L), jnp.float32),
        in_specs=[vmem] * 12,
        out_specs=vmem,
        scratch_shapes=[pltpu.VMEM((9 * F, L), MATMUL_DTYPE)],
    )(x_cm, h_idx, w_idx,
      w1t, g1.reshape(F, 1), b1.reshape(F, 1),
      w2f, g2.reshape(F, 1), b2.reshape(F, 1),
      w3t, g3.reshape(Cout, 1), b3.reshape(Cout, 1))

    return jnp.transpose(out_cm.reshape(Cout, N, H, W), (1, 0, 2, 3))


def reference_forward(x_nchw, params):
    """Pure-JAX reference (lax.conv) matching PyTorch training-mode BN semantics."""
    w1, g1, b1, w2, g2, b2, w3, g3, b3 = params

    def bn_relu(y, g, b):
        mean = jnp.mean(y, axis=(0, 2, 3), keepdims=True)
        var = jnp.mean((y - mean) ** 2, axis=(0, 2, 3), keepdims=True)
        yh = (y - mean) / jnp.sqrt(var + EPS)
        return jnp.maximum(yh * g.reshape(1, -1, 1, 1) + b.reshape(1, -1, 1, 1), 0.0)

    dn = jax.lax.conv_dimension_numbers(x_nchw.shape, (1, 1, 1, 1),
                                        ("NCHW", "OIHW", "NCHW"))
    # weights are stored as (Cin, Cout) for 1x1 and (kh, kw, Cin, Cout) for 3x3
    w1_oihw = jnp.transpose(w1, (1, 0))[:, :, None, None]
    w2_oihw = jnp.transpose(w2, (3, 2, 0, 1))
    w3_oihw = jnp.transpose(w3, (1, 0))[:, :, None, None]

    y = jax.lax.conv_general_dilated(x_nchw, w1_oihw, (1, 1), "VALID",
                                     dimension_numbers=dn)
    y = bn_relu(y, g1, b1)
    y = jax.lax.conv_general_dilated(y, w2_oihw, (1, 1), ((1, 1), (1, 1)),
                                     dimension_numbers=dn)
    y = bn_relu(y, g2, b2)
    y = jax.lax.conv_general_dilated(y, w3_oihw, (1, 1), "VALID",
                                     dimension_numbers=dn)
    y = bn_relu(y, g3, b3)
    return y


def init_params(key, in_channels, features, out_channels):
    ks = jax.random.split(key, 9)
    w1 = 0.1 * jax.random.normal(ks[0], (in_channels, features), jnp.float32)
    g1 = 1.0 + 0.1 * jax.random.normal(ks[1], (features,), jnp.float32)
    b1 = 0.1 * jax.random.normal(ks[2], (features,), jnp.float32)
    w2 = 0.1 * jax.random.normal(ks[3], (3, 3, features, features), jnp.float32)
    g2 = 1.0 + 0.1 * jax.random.normal(ks[4], (features,), jnp.float32)
    b2 = 0.1 * jax.random.normal(ks[5], (features,), jnp.float32)
    w3 = 0.1 * jax.random.normal(ks[6], (features, out_channels), jnp.float32)
    g3 = 1.0 + 0.1 * jax.random.normal(ks[7], (out_channels,), jnp.float32)
    b3 = 0.1 * jax.random.normal(ks[8], (out_channels,), jnp.float32)
    return (w1, g1, b1, w2, g2, b2, w3, g3, b3)


if __name__ == "__main__":
    key = jax.random.PRNGKey(0)
    kx, kp = jax.random.split(key)

    N, Cin, H, W = 2, 8, 16, 16
    features, Cout = 16, 16   # stride = 1 branch of Bottleneck

    x = jax.random.normal(kx, (N, Cin, H, W), jnp.float32)
    params = init_params(kp, Cin, features, Cout)

    out = bottleneck_forward(x, params)
    out = jax.block_until_ready(out)

    ref = jax.block_until_ready(reference_forward(x, params))
    assert out.shape == (N, Cout, H, W)
    assert jnp.allclose(out, ref, rtol=1e-3, atol=1e-3), (
        f"max abs err {jnp.max(jnp.abs(out - ref))}")

    print("KERNEL_OK")
</pallas_src>

<mosaic_0001>
module attributes {stable_mosaic.version = 11 : i64} {
  func.func @bottleneck_kernel(%arg0: memref<8x512xf32, #tpu.memory_space<vmem>>, %arg1: memref<1x512xi32, #tpu.memory_space<vmem>>, %arg2: memref<1x512xi32, #tpu.memory_space<vmem>>, %arg3: memref<16x8xf32, #tpu.memory_space<vmem>>, %arg4: memref<16x1xf32, #tpu.memory_space<vmem>>, %arg5: memref<16x1xf32, #tpu.memory_space<vmem>>, %arg6: memref<16x144xf32, #tpu.memory_space<vmem>>, %arg7: memref<16x1xf32, #tpu.memory_space<vmem>>, %arg8: memref<16x1xf32, #tpu.memory_space<vmem>>, %arg9: memref<16x16xf32, #tpu.memory_space<vmem>>, %arg10: memref<16x1xf32, #tpu.memory_space<vmem>>, %arg11: memref<16x1xf32, #tpu.memory_space<vmem>>, %arg12: memref<16x512xf32, #tpu.memory_space<vmem>>, %arg13: memref<144x512xf32, #tpu.memory_space<vmem>>) attributes {dimension_semantics = [], scalar_prefetch = 0 : i64, scratch_operands = 1 : i64, tpu.core_type = #tpu.core_type<tc>} {
    %c0 = arith.constant 0 : index
    %c0_0 = arith.constant 0 : index
    %0 = vector.load %arg3[%c0, %c0_0] : memref<16x8xf32, #tpu.memory_space<vmem>>, vector<16x8xf32>
    %c0_1 = arith.constant 0 : index
    %c0_2 = arith.constant 0 : index
    %1 = vector.load %arg0[%c0_1, %c0_2] : memref<8x512xf32, #tpu.memory_space<vmem>>, vector<8x512xf32>
    %cst = arith.constant dense<0.000000e+00> : vector<16x512xf32>
    %2 = tpu.matmul %0, %1, %cst {dimension_numbers = #tpu.dot_dimension_numbers<[1], [0], [0], [1], [0, 0, 1, 1], [], []>} : vector<16x8xf32>, vector<8x512xf32>, vector<16x512xf32> -> vector<16x512xf32>
    %cst_3 = arith.constant dense<0.000000e+00> : vector<16xf32>
    %3 = vector.multi_reduction <add>, %2, %cst_3 [1] : vector<16x512xf32> to vector<16xf32>
    %4 = vector.shape_cast %3 : vector<16xf32> to vector<16x1xf32>
    %5 = arith.mulf %2, %2 : vector<16x512xf32>
    %cst_4 = arith.constant dense<0.000000e+00> : vector<16xf32>
    %6 = vector.multi_reduction <add>, %5, %cst_4 [1] : vector<16x512xf32> to vector<16xf32>
    %7 = vector.shape_cast %6 : vector<16xf32> to vector<16x1xf32>
    %cst_5 = arith.constant 5.120000e+02 : f32
    %8 = vector.broadcast %cst_5 : f32 to vector<16x1xf32>
    %9 = arith.divf %4, %8 : vector<16x1xf32>
    %cst_6 = arith.constant 5.120000e+02 : f32
    %10 = vector.broadcast %cst_6 : f32 to vector<16x1xf32>
    %11 = arith.divf %7, %10 : vector<16x1xf32>
    %12 = arith.mulf %9, %9 : vector<16x1xf32>
    %13 = arith.subf %11, %12 : vector<16x1xf32>
    %c0_7 = arith.constant 0 : index
    %c0_8 = arith.constant 0 : index
    %14 = vector.load %arg4[%c0_7, %c0_8] : memref<16x1xf32, #tpu.memory_space<vmem>>, vector<16x1xf32>
    %cst_9 = arith.constant 9.99999974E-6 : f32
    %15 = vector.broadcast %cst_9 : f32 to vector<16x1xf32>
    %16 = arith.addf %13, %15 : vector<16x1xf32>
    %17 = math.rsqrt %16 : vector<16x1xf32>
    %18 = arith.mulf %14, %17 : vector<16x1xf32>
    %c0_10 = arith.constant 0 : index
    %c0_11 = arith.constant 0 : index
    %19 = vector.load %arg5[%c0_10, %c0_11] : memref<16x1xf32, #tpu.memory_space<vmem>>, vector<16x1xf32>
    %20 = arith.mulf %9, %18 : vector<16x1xf32>
    %21 = arith.subf %19, %20 : vector<16x1xf32>
    %22 = vector.broadcast %18 : vector<16x1xf32> to vector<16x512xf32>
    %23 = arith.mulf %2, %22 : vector<16x512xf32>
    %24 = vector.broadcast %21 : vector<16x1xf32> to vector<16x512xf32>
    %25 = arith.addf %23, %24 : vector<16x512xf32>
    %cst_12 = arith.constant 0.000000e+00 : f32
    %26 = vector.broadcast %cst_12 : f32 to vector<16x512xf32>
    %27 = arith.maximumf %25, %26 : vector<16x512xf32>
    %c0_13 = arith.constant 0 : index
    %c0_14 = arith.constant 0 : index
    %28 = vector.load %arg1[%c0_13, %c0_14] : memref<1x512xi32, #tpu.memory_space<vmem>>, vector<1x512xi32>
    %c0_15 = arith.constant 0 : index
    %c0_16 = arith.constant 0 : index
    %29 = vector.load %arg2[%c0_15, %c0_16] : memref<1x512xi32, #tpu.memory_space<vmem>>, vector<1x512xi32>
    %c1_i32 = arith.constant 1 : i32
    %30 = vector.broadcast %c1_i32 : i32 to vector<1x512xi32>
    %31 = arith.cmpi sge, %28, %30 : vector<1x512xi32>
    %cst_17 = arith.constant 1.000000e+00 : f32
    %cst_18 = arith.constant 0.000000e+00 : f32
    %32 = vector.broadcast %cst_17 : f32 to vector<1x512xf32>
    %33 = vector.broadcast %cst_18 : f32 to vector<1x512xf32>
    %34 = arith.select %31, %32, %33 : vector<1x512xi1>, vector<1x512xf32>
    %c15_i32 = arith.constant 15 : i32
    %35 = vector.broadcast %c15_i32 : i32 to vector<1x512xi32>
    %36 = arith.cmpi slt, %28, %35 : vector<1x512xi32>
    %cst_19 = arith.constant 1.000000e+00 : f32
    %cst_20 = arith.constant 0.000000e+00 : f32
    %37 = vector.broadcast %cst_19 : f32 to vector<1x512xf32>
    %38 = vector.broadcast %cst_20 : f32 to vector<1x512xf32>
    %39 = arith.select %36, %37, %38 : vector<1x512xi1>, vector<1x512xf32>
    %c1_i32_21 = arith.constant 1 : i32
    %40 = vector.broadcast %c1_i32_21 : i32 to vector<1x512xi32>
    %41 = arith.cmpi sge, %29, %40 : vector<1x512xi32>
    %cst_22 = arith.constant 1.000000e+00 : f32
    %cst_23 = arith.constant 0.000000e+00 : f32
    %42 = vector.broadcast %cst_22 : f32 to vector<1x512xf32>
    %43 = vector.broadcast %cst_23 : f32 to vector<1x512xf32>
    %44 = arith.select %41, %42, %43 : vector<1x512xi1>, vector<1x512xf32>
    %c15_i32_24 = arith.constant 15 : i32
    %45 = vector.broadcast %c15_i32_24 : i32 to vector<1x512xi32>
    %46 = arith.cmpi slt, %29, %45 : vector<1x512xi32>
    %cst_25 = arith.constant 1.000000e+00 : f32
    %cst_26 = arith.constant 0.000000e+00 : f32
    %47 = vector.broadcast %cst_25 : f32 to vector<1x512xf32>
    %48 = vector.broadcast %cst_26 : f32 to vector<1x512xf32>
    %49 = arith.select %46, %47, %48 : vector<1x512xi1>, vector<1x512xf32>
    %c17_i32 = arith.constant 17 : i32
    %50 = tpu.dynamic_rotate %27 by %c17_i32 dim 1 : vector<16x512xf32>, i32 -> vector<16x512xf32>
    %51 = arith.mulf %34, %44 : vector<1x512xf32>
    %52 = vector.broadcast %51 : vector<1x512xf32> to vector<16x512xf32>
    %53 = arith.mulf %50, %52 : vector<16x512xf32>
    %c0_27 = arith.constant 0 : index
    %c0_28 = arith.constant 0 : index
    %54 = vector.load %arg13[%c0_27, %c0_28] : memref<144x512xf32, #tpu.memory_space<vmem>>, vector<16x512xf32>
    tpu.vector_store %arg13[%c0_27, %c0_28], %53 {strides = array<i32>} : memref<144x512xf32, #tpu.memory_space<vmem>>, vector<16x512xf32>,
    %c16_i32 = arith.constant 16 : i32
    %55 = tpu.dynamic_rotate %27 by %c16_i32 dim 1 : vector<16x512xf32>, i32 -> vector<16x512xf32>
    %56 = vector.broadcast %34 : vector<1x512xf32> to vector<16x512xf32>
    %57 = arith.mulf %55, %56 : vector<16x512xf32>
    %c16 = arith.constant 16 : index
    %c0_29 = arith.constant 0 : index
    %58 = vector.load %arg13[%c16, %c0_29] : memref<144x512xf32, #tpu.memory_space<vmem>>, vector<16x512xf32>
    tpu.vector_store %arg13[%c16, %c0_29], %57 {strides = array<i32>} : memref<144x512xf32, #tpu.memory_space<vmem>>, vector<16x512xf32>,
    %c15_i32_30 = arith.constant 15 : i32
    %59 = tpu.dynamic_rotate %27 by %c15_i32_30 dim 1 : vector<16x512xf32>, i32 -> vector<16x512xf32>
    %60 = arith.mulf %34, %49 : vector<1x512xf32>
    %61 = vector.broadcast %60 : vector<1x512xf32> to vector<16x512xf32>
    %62 = arith.mulf %59, %61 : vector<16x512xf32>
    %c32 = arith.constant 32 : index
    %c0_31 = arith.constant 0 : index
    %63 = vector.load %arg13[%c32, %c0_31] : memref<144x512xf32, #tpu.memory_space<vmem>>, vector<16x512xf32>
    tpu.vector_store %arg13[%c32, %c0_31], %62 {strides = array<i32>} : memref<144x512xf32, #tpu.memory_space<vmem>>, vector<16x512xf32>,
    %c1_i32_32 = arith.constant 1 : i32
    %64 = tpu.dynamic_rotate %27 by %c1_i32_32 dim 1 : vector<16x512xf32>, i32 -> vector<16x512xf32>
    %65 = vector.broadcast %44 : vector<1x512xf32> to vector<16x512xf32>
    %66 = arith.mulf %64, %65 : vector<16x512xf32>
    %c48 = arith.constant 48 : index
    %c0_33 = arith.constant 0 : index
    %67 = vector.load %arg13[%c48, %c0_33] : memref<144x512xf32, #tpu.memory_space<vmem>>, vector<16x512xf32>
    tpu.vector_store %arg13[%c48, %c0_33], %66 {strides = array<i32>} : memref<144x512xf32, #tpu.memory_space<vmem>>, vector<16x512xf32>,
    %c64 = arith.constant 64 : index
    %c0_34 = arith.constant 0 : index
    %68 = vector.load %arg13[%c64, %c0_34] : memref<144x512xf32, #tpu.memory_space<vmem>>, vector<16x512xf32>
    tpu.vector_store %arg13[%c64, %c0_34], %27 {strides = array<i32>} : memref<144x512xf32, #tpu.memory_space<vmem>>, vector<16x512xf32>,
    %c511_i32 = arith.constant 511 : i32
    %69 = tpu.dynamic_rotate %27 by %c511_i32 dim 1 : vector<16x512xf32>, i32 -> vector<16x512xf32>
    %70 = vector.broadcast %49 : vector<1x512xf32> to vector<16x512xf32>
    %71 = arith.mulf %69, %70 : vector<16x512xf32>
    %c80 = arith.constant 80 : index
    %c0_35 = arith.constant 0 : index
    %72 = vector.load %arg13[%c80, %c0_35] : memref<144x512xf32, #tpu.memory_space<vmem>>, vector<16x512xf32>
    tpu.vector_store %arg13[%c80, %c0_35], %71 {strides = array<i32>} : memref<144x512xf32, #tpu.memory_space<vmem>>, vector<16x512xf32>,
    %c497_i32 = arith.constant 497 : i32
    %73 = tpu.dynamic_rotate %27 by %c497_i32 dim 1 : vector<16x512xf32>, i32 -> vector<16x512xf32>
    %74 = arith.mulf %39, %44 : vector<1x512xf32>
    %75 = vector.broadcast %74 : vector<1x512xf32> to vector<16x512xf32>
    %76 = arith.mulf %73, %75 : vector<16x512xf32>
    %c96 = arith.constant 96 : index
    %c0_36 = arith.constant 0 : index
    %77 = vector.load %arg13[%c96, %c0_36] : memref<144x512xf32, #tpu.memory_space<vmem>>, vector<16x512xf32>
    tpu.vector_store %arg13[%c96, %c0_36], %76 {strides = array<i32>} : memref<144x512xf32, #tpu.memory_space<vmem>>, vector<16x512xf32>,
    %c496_i32 = arith.constant 496 : i32
    %78 = tpu.dynamic_rotate %27 by %c496_i32 dim 1 : vector<16x512xf32>, i32 -> vector<16x512xf32>
    %79 = vector.broadcast %39 : vector<1x512xf32> to vector<16x512xf32>
    %80 = arith.mulf %78, %79 : vector<16x512xf32>
    %c112 = arith.constant 112 : index
    %c0_37 = arith.constant 0 : index
    %81 = vector.load %arg13[%c112, %c0_37] : memref<144x512xf32, #tpu.memory_space<vmem>>, vector<16x512xf32>
    tpu.vector_store %arg13[%c112, %c0_37], %80 {strides = array<i32>} : memref<144x512xf32, #tpu.memory_space<vmem>>, vector<16x512xf32>,
    %c495_i32 = arith.constant 495 : i32
    %82 = tpu.dynamic_rotate %27 by %c495_i32 dim 1 : vector<16x512xf32>, i32 -> vector<16x512xf32>
    %83 = arith.mulf %39, %49 : vector<1x512xf32>
    %84 = vector.broadcast %83 : vector<1x512xf32> to vector<16x512xf32>
    %85 = arith.mulf %82, %84 : vector<16x512xf32>
    %c128 = arith.constant 128 : index
    %c0_38 = arith.constant 0 : index
    %86 = vector.load %arg13[%c128, %c0_38] : memref<144x512xf32, #tpu.memory_space<vmem>>, vector<16x512xf32>
    tpu.vector_store %arg13[%c128, %c0_38], %85 {strides = array<i32>} : memref<144x512xf32, #tpu.memory_space<vmem>>, vector<16x512xf32>,
    %c0_39 = arith.constant 0 : index
    %c0_40 = arith.constant 0 : index
    %87 = vector.load %arg6[%c0_39, %c0_40] : memref<16x144xf32, #tpu.memory_space<vmem>>, vector<16x144xf32>
    %c0_41 = arith.constant 0 : index
    %c0_42 = arith.constant 0 : index
    %88 = vector.load %arg13[%c0_41, %c0_42] : memref<144x512xf32, #tpu.memory_space<vmem>>, vector<144x512xf32>
    %cst_43 = arith.constant dense<0.000000e+00> : vector<16x512xf32>
    %89 = tpu.matmul %87, %88, %cst_43 {dimension_numbers = #tpu.dot_dimension_numbers<[1], [0], [0], [1], [0, 0, 1, 1], [], []>} : vector<16x144xf32>, vector<144x512xf32>, vector<16x512xf32> -> vector<16x512xf32>
    %cst_44 = arith.constant dense<0.000000e+00> : vector<16xf32>
    %90 = vector.multi_reduction <add>, %89, %cst_44 [1] : vector<16x512xf32> to vector<16xf32>
    %91 = vector.shape_cast %90 : vector<16xf32> to vector<16x1xf32>
    %92 = arith.mulf %89, %89 : vector<16x512xf32>
    %cst_45 = arith.constant dense<0.000000e+00> : vector<16xf32>
    %93 = vector.multi_reduction <add>, %92, %cst_45 [1] : vector<16x512xf32> to vector<16xf32>
    %94 = vector.shape_cast %93 : vector<16xf32> to vector<16x1xf32>
    %cst_46 = arith.constant 5.120000e+02 : f32
    %95 = vector.broadcast %cst_46 : f32 to vector<16x1xf32>
    %96 = arith.divf %91, %95 : vector<16x1xf32>
    %cst_47 = arith.constant 5.120000e+02 : f32
    %97 = vector.broadcast %cst_47 : f32 to vector<16x1xf32>
    %98 = arith.divf %94, %97 : vector<16x1xf32>
    %99 = arith.mulf %96, %96 : vector<16x1xf32>
    %100 = arith.subf %98, %99 : vector<16x1xf32>
    %c0_48 = arith.constant 0 : index
    %c0_49 = arith.constant 0 : index
    %101 = vector.load %arg7[%c0_48, %c0_49] : memref<16x1xf32, #tpu.memory_space<vmem>>, vector<16x1xf32>
    %cst_50 = arith.constant 9.99999974E-6 : f32
    %102 = vector.broadcast %cst_50 : f32 to vector<16x1xf32>
    %103 = arith.addf %100, %102 : vector<16x1xf32>
    %104 = math.rsqrt %103 : vector<16x1xf32>
    %105 = arith.mulf %101, %104 : vector<16x1xf32>
    %c0_51 = arith.constant 0 : index
    %c0_52 = arith.constant 0 : index
    %106 = vector.load %arg8[%c0_51, %c0_52] : memref<16x1xf32, #tpu.memory_space<vmem>>, vector<16x1xf32>
    %107 = arith.mulf %96, %105 : vector<16x1xf32>
    %108 = arith.subf %106, %107 : vector<16x1xf32>
    %109 = vector.broadcast %105 : vector<16x1xf32> to vector<16x512xf32>
    %110 = arith.mulf %89, %109 : vector<16x512xf32>
    %111 = vector.broadcast %108 : vector<16x1xf32> to vector<16x512xf32>
    %112 = arith.addf %110, %111 : vector<16x512xf32>
    %cst_53 = arith.constant 0.000000e+00 : f32
    %113 = vector.broadcast %cst_53 : f32 to vector<16x512xf32>
    %114 = arith.maximumf %112, %113 : vector<16x512xf32>
    %c0_54 = arith.constant 0 : index
    %c0_55 = arith.constant 0 : index
    %115 = vector.load %arg9[%c0_54, %c0_55] : memref<16x16xf32, #tpu.memory_space<vmem>>, vector<16x16xf32>
    %cst_56 = arith.constant dense<0.000000e+00> : vector<16x512xf32>
    %116 = tpu.matmul %115, %114, %cst_56 {dimension_numbers = #tpu.dot_dimension_numbers<[1], [0], [0], [1], [0, 0, 1, 1], [], []>} : vector<16x16xf32>, vector<16x512xf32>, vector<16x512xf32> -> vector<16x512xf32>
    %cst_57 = arith.constant dense<0.000000e+00> : vector<16xf32>
    %117 = vector.multi_reduction <add>, %116, %cst_57 [1] : vector<16x512xf32> to vector<16xf32>
    %118 = vector.shape_cast %117 : vector<16xf32> to vector<16x1xf32>
    %119 = arith.mulf %116, %116 : vector<16x512xf32>
    %cst_58 = arith.constant dense<0.000000e+00> : vector<16xf32>
    %120 = vector.multi_reduction <add>, %119, %cst_58 [1] : vector<16x512xf32> to vector<16xf32>
    %121 = vector.shape_cast %120 : vector<16xf32> to vector<16x1xf32>
    %cst_59 = arith.constant 5.120000e+02 : f32
    %122 = vector.broadcast %cst_59 : f32 to vector<16x1xf32>
    %123 = arith.divf %118, %122 : vector<16x1xf32>
    %cst_60 = arith.constant 5.120000e+02 : f32
    %124 = vector.broadcast %cst_60 : f32 to vector<16x1xf32>
    %125 = arith.divf %121, %124 : vector<16x1xf32>
    %126 = arith.mulf %123, %123 : vector<16x1xf32>
    %127 = arith.subf %125, %126 : vector<16x1xf32>
    %c0_61 = arith.constant 0 : index
    %c0_62 = arith.constant 0 : index
    %128 = vector.load %arg10[%c0_61, %c0_62] : memref<16x1xf32, #tpu.memory_space<vmem>>, vector<16x1xf32>
    %cst_63 = arith.constant 9.99999974E-6 : f32
    %129 = vector.broadcast %cst_63 : f32 to vector<16x1xf32>
    %130 = arith.addf %127, %129 : vector<16x1xf32>
    %131 = math.rsqrt %130 : vector<16x1xf32>
    %132 = arith.mulf %128, %131 : vector<16x1xf32>
    %c0_64 = arith.constant 0 : index
    %c0_65 = arith.constant 0 : index
    %133 = vector.load %arg11[%c0_64, %c0_65] : memref<16x1xf32, #tpu.memory_space<vmem>>, vector<16x1xf32>
    %134 = arith.mulf %123, %132 : vector<16x1xf32>
    %135 = arith.subf %133, %134 : vector<16x1xf32>
    %136 = vector.broadcast %132 : vector<16x1xf32> to vector<16x512xf32>
    %137 = arith.mulf %116, %136 : vector<16x512xf32>
    %138 = vector.broadcast %135 : vector<16x1xf32> to vector<16x512xf32>
    %139 = arith.addf %137, %138 : vector<16x512xf32>
    %cst_66 = arith.constant 0.000000e+00 : f32
    %140 = vector.broadcast %cst_66 : f32 to vector<16x512xf32>
    %141 = arith.maximumf %139, %140 : vector<16x512xf32>
    %c0_67 = arith.constant 0 : index
    %c0_68 = arith.constant 0 : index
    %142 = vector.load %arg12[%c0_67, %c0_68] : memref<16x512xf32, #tpu.memory_space<vmem>>, vector<16x512xf32>
    tpu.vector_store %arg12[%c0_67, %c0_68], %141 {strides = array<i32>} : memref<16x512xf32, #tpu.memory_space<vmem>>, vector<16x512xf32>,
    return
  }
}

</mosaic_0001>

<llo_original>
// kernel: tpu_custom_call.1
$region0: #{tpu_custom_call.1}
  #allocation0 [shape = 'u32[]', space=smem, size = 0x4, offset = 0x4, fixed_abs, tag = 'smem constant byte address 0x4 - core index']
  #allocation1 [shape = 'u32[144,128]{1,0:T(1,128)}', space=vmem, size = 0x12000, scoped, tag = 'internal scratch']
  #allocation2 [shape = 'f32[144,512]{1,0:T(8,128)}', space=vmem, size = 0x48000, scoped, tag = 'scratch operand']
  %s0 = inlined_call_operand.vmem [shape: f32[8,512], index: 0, kind: input, shape index: {}]
  %s1 = inlined_call_operand.vmem [shape: s32[1,512], index: 1, kind: input, shape index: {}]
  %s2 = inlined_call_operand.vmem [shape: s32[1,512], index: 2, kind: input, shape index: {}]
  %s3 = inlined_call_operand.vmem [shape: f32[16,8], index: 3, kind: input, shape index: {}]
  %s4 = inlined_call_operand.vmem [shape: f32[16,1], index: 4, kind: input, shape index: {}]
  %s5 = inlined_call_operand.vmem [shape: f32[16,1], index: 5, kind: input, shape index: {}]
  %s6 = inlined_call_operand.vmem [shape: f32[16,144], index: 6, kind: input, shape index: {}]
  %s7 = inlined_call_operand.vmem [shape: f32[16,1], index: 7, kind: input, shape index: {}]
  %s8 = inlined_call_operand.vmem [shape: f32[16,1], index: 8, kind: input, shape index: {}]
  %s9 = inlined_call_operand.vmem [shape: f32[16,16], index: 9, kind: input, shape index: {}]
  %s10 = inlined_call_operand.vmem [shape: f32[16,1], index: 10, kind: input, shape index: {}]
  %s11 = inlined_call_operand.vmem [shape: f32[16,1], index: 11, kind: input, shape index: {}]
  %s12 = inlined_call_operand.hbm [shape: f32[16,512], index: 12, kind: output, shape index: {}]
  %s13 = sld [smem:[#allocation0]]
  $region58: #{tpu_custom_call.1} parent=0
    _
  %s15 = ssub.s32 1, %s13
  %s16 = scalar_select 0, %s15, %s13
  $region1: #{tpu_custom_call.1} parent=0
    #allocation3 [shape = 'u8[32768]{0}', space=vmem, size = 0x8000, scoped, tag = 'output window, operand 0, single buffered']
    #allocation4 [shape = 's32[1]{0}', space=sflag, size = 0x4, scoped, tag = 'scoped memory for tpu_custom_call.1']
    %17 = vsyncpa [#allocation4], 0
    // Predicated region
    $region2: #{tpu_custom_call.1} parent=1 // pred_check
      _
    $region3: #{tpu_custom_call.1} parent=1 // pred_check_branch
      %19 = sbr.rel (0) target = $region5
    $region4: #{tpu_custom_call.1} parent=1 // pred_region
      _
    $region5: #{tpu_custom_call.1} parent=1 // pred_fallthru
      _
    // Predicated region
    $region6: #{tpu_custom_call.1} parent=1 // pred_check
      _
    $region7: #{tpu_custom_call.1} parent=1 // pred_check_branch
      %21 = sbr.rel (0) target = $region9
    $region8: #{tpu_custom_call.1} parent=1 // pred_region
      _
    $region9: #{tpu_custom_call.1} parent=1 // pred_fallthru
      _
    // Predicated region
    $region10: #{tpu_custom_call.1} parent=1 // pred_check
      _
    $region11: #{tpu_custom_call.1} parent=1 // pred_check_branch
      %23 = sbr.rel (0) target = $region13
    $region12: #{tpu_custom_call.1} parent=1 // pred_region
      _
    $region13: #{tpu_custom_call.1} parent=1 // pred_fallthru
      _
    // Predicated region
    $region14: #{tpu_custom_call.1} parent=1 // pred_check
      _
    $region15: #{tpu_custom_call.1} parent=1 // pred_check_branch
      %25 = sbr.rel (0) target = $region17
    $region16: #{tpu_custom_call.1} parent=1 // pred_region
      _
    $region17: #{tpu_custom_call.1} parent=1 // pred_fallthru
      _
    // Predicated region
    $region18: #{tpu_custom_call.1} parent=1 // pred_check
      _
    $region19: #{tpu_custom_call.1} parent=1 // pred_check_branch
      %27 = sbr.rel (0) target = $region21
    $region20: #{tpu_custom_call.1} parent=1 // pred_region
      _
    $region21: #{tpu_custom_call.1} parent=1 // pred_fallthru
      _
    // Predicated region
    $region22: #{tpu_custom_call.1} parent=1 // pred_check
      _
    $region23: #{tpu_custom_call.1} parent=1 // pred_check_branch
      %29 = sbr.rel (0) target = $region25
    $region24: #{tpu_custom_call.1} parent=1 // pred_region
      _
    $region25: #{tpu_custom_call.1} parent=1 // pred_fallthru
      _
    // Predicated region
    $region26: #{tpu_custom_call.1} parent=1 // pred_check
      _
    $region27: #{tpu_custom_call.1} parent=1 // pred_check_branch
      %31 = sbr.rel (0) target = $region29
    $region28: #{tpu_custom_call.1} parent=1 // pred_region
      _
    $region29: #{tpu_custom_call.1} parent=1 // pred_fallthru
      _
    // Predicated region
    $region30: #{tpu_custom_call.1} parent=1 // pred_check
      _
    $region31: #{tpu_custom_call.1} parent=1 // pred_check_branch
      %33 = sbr.rel (0) target = $region33
    $region32: #{tpu_custom_call.1} parent=1 // pred_region
      _
    $region33: #{tpu_custom_call.1} parent=1 // pred_fallthru
      _
    // Predicated region
    $region34: #{tpu_custom_call.1} parent=1 // pred_check
      _
    $region35: #{tpu_custom_call.1} parent=1 // pred_check_branch
      %35 = sbr.rel (0) target = $region37
    $region36: #{tpu_custom_call.1} parent=1 // pred_region
      _
    $region37: #{tpu_custom_call.1} parent=1 // pred_fallthru
      _
    // Predicated region
    $region38: #{tpu_custom_call.1} parent=1 // pred_check
      _
    $region39: #{tpu_custom_call.1} parent=1 // pred_check_branch
      %37 = sbr.rel (0) target = $region41
    $region40: #{tpu_custom_call.1} parent=1 // pred_region
      _
    $region41: #{tpu_custom_call.1} parent=1 // pred_fallthru
      _
    // Predicated region
    $region42: #{tpu_custom_call.1} parent=1 // pred_check
      _
    $region43: #{tpu_custom_call.1} parent=1 // pred_check_branch
      %39 = sbr.rel (0) target = $region45
    $region44: #{tpu_custom_call.1} parent=1 // pred_region
      _
    $region45: #{tpu_custom_call.1} parent=1 // pred_fallthru
      _
    // Predicated region
    $region46: #{tpu_custom_call.1} parent=1 // pred_check
      _
    $region47: #{tpu_custom_call.1} parent=1 // pred_check_branch
      %41 = sbr.rel (0) target = $region49
    $region48: #{tpu_custom_call.1} parent=1 // pred_region
      _
    $region49: #{tpu_custom_call.1} parent=1 // pred_fallthru
      _
    %v42 = vld [vmem:[%s3] sm:$0xff]
    %v43 = vld [vmem:[%s3 + $0x8] sm:$0xff]
    %v44 = vld [vmem:[%s0] sm:$0xff]
    %v45 = vld [vmem:[%s0 + $0x8] sm:$0xff]
    %v46 = vld [vmem:[%s0 + $0x10] sm:$0xff]
    %v47 = vld [vmem:[%s0 + $0x18] sm:$0xff]
    %vm48 = vcmask 64512
    %v50 = vsel %vm48, %v42, 0
    %v53 = vsel %vm48, %v43, 0
    %55 = vmatprep.subr.mxu0 %v45
    %56 = vmatpush1.msra.mxu0 %v44
    %57 = vmatprep.subr.mxu0 0.0
    %58 = vmatpush1.msra.mxu0 0.0
    %59 = vmatprep.subr.mxu0 0.0
    %60 = vmatpush1.msra.mxu0 0.0
    %61 = vmatprep.subr.mxu0 0.0
    %62 = vmatpush1.msra.mxu0 0.0
    %63 = vmatprep.subr.mxu0 0.0
    %64 = vmatpush1.msra.mxu0 0.0
    %65 = vmatprep.subr.mxu0 0.0
    %66 = vmatpush1.msra.mxu0 0.0
    %67 = vmatprep.subr.mxu0 0.0
    %68 = vmatpush1.msra.mxu0 0.0
    %69 = vmatprep.subr.mxu0 0.0
    %70 = vmatpush1.msra.mxu0 0.0
    %71 = vmatprep.subr.mxu0 0.0
    %72 = vmatpush1.msra.mxu0 0.0
    %73 = vmatprep.subr.mxu0 0.0
    %74 = vmatpush1.msra.mxu0 0.0
    %75 = vmatprep.subr.mxu0 0.0
    %76 = vmatpush1.msra.mxu0 0.0
    %77 = vmatprep.subr.mxu0 0.0
    %78 = vmatpush1.msra.mxu0 0.0
    %79 = vmatprep.subr.mxu0 0.0
    %80 = vmatpush1.msra.mxu0 0.0
    %81 = vmatprep.subr.mxu0 0.0
    %82 = vmatpush1.msra.mxu0 0.0
    %83 = vmatprep.subr.mxu0 0.0
    %84 = vmatpush1.msra.mxu0 0.0
    %85 = vmatprep.subr.mxu0 0.0
    %86 = vmatpush1.msra.mxu0 0.0
    %87 = vmatprep.subr.mxu0 0.0
    %88 = vmatpush1.msra.mxu0 0.0
    %89 = vmatprep.subr.mxu0 0.0
    %90 = vmatpush1.msra.mxu0 0.0
    %91 = vmatprep.subr.mxu0 0.0
    %92 = vmatpush1.msra.mxu0 0.0
    %93 = vmatprep.subr.mxu0 0.0
    %94 = vmatpush1.msra.mxu0 0.0
    %95 = vmatprep.subr.mxu0 0.0
    %96 = vmatpush1.msra.mxu0 0.0
    %97 = vmatprep.subr.mxu0 0.0
    %98 = vmatpush1.msra.mxu0 0.0
    %99 = vmatprep.subr.mxu0 0.0
    %100 = vmatpush1.msra.mxu0 0.0
    %101 = vmatprep.subr.mxu0 0.0
    %102 = vmatpush1.msra.mxu0 0.0
    %103 = vmatprep.subr.mxu0 0.0
    %104 = vmatpush1.msra.mxu0 0.0
    %105 = vmatprep.subr.mxu0 0.0
    %106 = vmatpush1.msra.mxu0 0.0
    %107 = vmatprep.subr.mxu0 0.0
    %108 = vmatpush1.msra.mxu0 0.0
    %109 = vmatprep.subr.mxu0 0.0
    %110 = vmatpush1.msra.mxu0 0.0
    %111 = vmatprep.subr.mxu0 0.0
    %112 = vmatpush1.msra.mxu0 0.0
    %113 = vmatprep.subr.mxu0 0.0
    %114 = vmatpush1.msra.mxu0 0.0
    %115 = vmatprep.subr.mxu0 0.0
    %116 = vmatpush1.msra.mxu0 0.0
    %117 = vmatprep.subr.mxu0 0.0
    %118 = vmatpush1.msra.mxu0 0.0
    %119 = vmatprep.mubr.f32.mxu0 0.0
    %120 = vmatmul.mubr.f32.gmra.mrb[0].mxu0 %v50
    %v121 = vpop.f32.mrb[0].mxu0
    %v122 = vadd.f32 0.0, %v121
    %v123 = vpop.f32.mrb[0].mxu0
    %v124 = vadd.f32 0.0, %v123
    %125 = vmatprep.mubr.f32.mxu0 0.0
    %126 = vmatmul.mubr.f32.gmra.mrb[0].mxu0 %v53
    %v127 = vpop.f32.mrb[0].mxu0
    %v128 = vadd.f32 0.0, %v127
    %v129 = vpop.f32.mrb[0].mxu0
    %v130 = vadd.f32 0.0, %v129
    %131 = vdwg.mxu0
    %132 = vmatprep.subr.mxu0 %v47
    %133 = vmatpush1.msra.mxu0 %v46
    %134 = vmatprep.subr.mxu0 0.0
    %135 = vmatpush1.msra.mxu0 0.0
    %136 = vmatprep.subr.mxu0 0.0
    %137 = vmatpush1.msra.mxu0 0.0
    %138 = vmatprep.subr.mxu0 0.0
    %139 = vmatpush1.msra.mxu0 0.0
    %140 = vmatprep.subr.mxu0 0.0
    %141 = vmatpush1.msra.mxu0 0.0
    %142 = vmatprep.subr.mxu0 0.0
    %143 = vmatpush1.msra.mxu0 0.0
    %144 = vmatprep.subr.mxu0 0.0
    %145 = vmatpush1.msra.mxu0 0.0
    %146 = vmatprep.subr.mxu0 0.0
    %147 = vmatpush1.msra.mxu0 0.0
    %148 = vmatprep.subr.mxu0 0.0
    %149 = vmatpush1.msra.mxu0 0.0
    %150 = vmatprep.subr.mxu0 0.0
    %151 = vmatpush1.msra.mxu0 0.0
    %152 = vmatprep.subr.mxu0 0.0
    %153 = vmatpush1.msra.mxu0 0.0
    %154 = vmatprep.subr.mxu0 0.0
    %155 = vmatpush1.msra.mxu0 0.0
    %156 = vmatprep.subr.mxu0 0.0
    %157 = vmatpush1.msra.mxu0 0.0
    %158 = vmatprep.subr.mxu0 0.0
    %159 = vmatpush1.msra.mxu0 0.0
    %160 = vmatprep.subr.mxu0 0.0
    %161 = vmatpush1.msra.mxu0 0.0
    %162 = vmatprep.subr.mxu0 0.0
    %163 = vmatpush1.msra.mxu0 0.0
    %164 = vmatprep.subr.mxu0 0.0
    %165 = vmatpush1.msra.mxu0 0.0
    %166 = vmatprep.subr.mxu0 0.0
    %167 = vmatpush1.msra.mxu0 0.0
    %168 = vmatprep.subr.mxu0 0.0
    %169 = vmatpush1.msra.mxu0 0.0
    %170 = vmatprep.subr.mxu0 0.0
    %171 = vmatpush1.msra.mxu0 0.0
    %172 = vmatprep.subr.mxu0 0.0
    %173 = vmatpush1.msra.mxu0 0.0
    %174 = vmatprep.subr.mxu0 0.0
    %175 = vmatpush1.msra.mxu0 0.0
    %176 = vmatprep.subr.mxu0 0.0
    %177 = vmatpush1.msra.mxu0 0.0
    %178 = vmatprep.subr.mxu0 0.0
    %179 = vmatpush1.msra.mxu0 0.0
    %180 = vmatprep.subr.mxu0 0.0
    %181 = vmatpush1.msra.mxu0 0.0
    %182 = vmatprep.subr.mxu0 0.0
    %183 = vmatpush1.msra.mxu0 0.0
    %184 = vmatprep.subr.mxu0 0.0
    %185 = vmatpush1.msra.mxu0 0.0
    %186 = vmatprep.subr.mxu0 0.0
    %187 = vmatpush1.msra.mxu0 0.0
    %188 = vmatprep.subr.mxu0 0.0
    %189 = vmatpush1.msra.mxu0 0.0
    %190 = vmatprep.subr.mxu0 0.0
    %191 = vmatpush1.msra.mxu0 0.0
    %192 = vmatprep.subr.mxu0 0.0
    %193 = vmatpush1.msra.mxu0 0.0
    %194 = vmatprep.subr.mxu0 0.0
    %195 = vmatpush1.msra.mxu0 0.0
    %196 = vmatprep.mubr.f32.mxu0 0.0
    %197 = vmatmul.mubr.f32.gmra.mrb[0].mxu0 %v50
    %v198 = vpop.f32.mrb[0].mxu0
    %v199 = vadd.f32 0.0, %v198
    %v200 = vpop.f32.mrb[0].mxu0
    %v201 = vadd.f32 0.0, %v200
    %202 = vmatprep.mubr.f32.mxu0 0.0
    %203 = vmatmul.mubr.f32.gmra.mrb[0].mxu0 %v53
    %v204 = vpop.f32.mrb[0].mxu0
    %v205 = vadd.f32 0.0, %v204
    %v206 = vpop.f32.mrb[0].mxu0
    %v207 = vadd.f32 0.0, %v206
    %208 = vdwg.mxu0
    %v209 = vadd.f32 %v122, %v124
    %v210 = vadd.f32 %v209, %v199
    %v211 = vadd.f32 %v210, %v201
    %212 = vadd.xlane.f32.xlu0 %v211
    %v213 = vpop.xlane.xlu0 %212
    %v214 = vadd.f32 %v128, %v130
    %v215 = vadd.f32 %v214, %v205
    %v216 = vadd.f32 %v215, %v207
    %217 = vadd.xlane.f32.xlu0 %v216
    %v218 = vpop.xlane.xlu0 %217
    %v219 = vmul.f32 %v122, %v122
    %v220 = vmul.f32 %v124, %v124
    %v221 = vmul.f32 %v199, %v199
    %v222 = vmul.f32 %v201, %v201
    %v223 = vmul.f32 %v128, %v128
    %v224 = vmul.f32 %v130, %v130
    %v225 = vmul.f32 %v205, %v205
    %v226 = vmul.f32 %v207, %v207
    %v227 = vadd.f32 %v219, %v220
    %v228 = vadd.f32 %v227, %v221
    %v229 = vadd.f32 %v228, %v222
    %230 = vadd.xlane.f32.xlu0 %v229
    %v231 = vpop.xlane.xlu0 %230
    %v232 = vadd.f32 %v223, %v224
    %v233 = vadd.f32 %v232, %v225
    %v234 = vadd.f32 %v233, %v226
    %235 = vadd.xlane.f32.xlu0 %v234
    %v236 = vpop.xlane.xlu0 %235
    %v237 = vrcp.pop 512.0
    %v238 = vmul.f32 %v213, %v237
    %v239 = vmul.f32 %v218, %v237
    %v240 = vmul.f32 %v231, %v237
    %v241 = vmul.f32 %v236, %v237
    %v242 = vmul.f32 %v238, %v238
    %v243 = vmul.f32 %v239, %v239
    %v244 = vsub.f32 %v240, %v242
    %v245 = vsub.f32 %v241, %v243
    %v246 = vld [vmem:[%s4] sm:$0xff]
    %v247 = vld [vmem:[%s4 + $0x8] sm:$0xff]
    %v248 = vadd.f32 %v244, 1e-05
    %v249 = vadd.f32 %v245, 1e-05
    %v250 = vrsqrt.pop %v248
    %v251 = vrsqrt.pop %v249
    %v252 = vmul.f32 %v246, %v250
    %v253 = vmul.f32 %v247, %v251
    %v254 = vld [vmem:[%s5] sm:$0xff]
    %v255 = vld [vmem:[%s5 + $0x8] sm:$0xff]
    %v256 = vmul.f32 %v238, %v252
    %v257 = vmul.f32 %v239, %v253
    %v258 = vsub.f32 %v254, %v256
    %v259 = vsub.f32 %v255, %v257
    %261 = vset.pattern.permute.xlu0 0
    %262 = vperm.xlu0 %261, %v252
    %v263 = vpop.permute.xlu0 %262
    %266 = vset.pattern.permute.xlu0 0
    %267 = vperm.xlu0 %266, %v253
    %v268 = vpop.permute.xlu0 %267
    %v270 = vmul.f32 %v122, %v263
    %v271 = vmul.f32 %v124, %v263
    %v272 = vmul.f32 %v199, %v263
    %v273 = vmul.f32 %v201, %v263
    %v274 = vmul.f32 %v128, %v268
    %v275 = vmul.f32 %v130, %v268
    %v276 = vmul.f32 %v205, %v268
    %v277 = vmul.f32 %v207, %v268
    %279 = vset.pattern.permute.xlu0 0
    %280 = vperm.xlu0 %279, %v258
    %v281 = vpop.permute.xlu0 %280
    %284 = vset.pattern.permute.xlu0 0
    %285 = vperm.xlu0 %284, %v259
    %v286 = vpop.permute.xlu0 %285
    %v288 = vadd.f32 %v270, %v281
    %v289 = vadd.f32 %v271, %v281
    %v290 = vadd.f32 %v272, %v281
    %v291 = vadd.f32 %v273, %v281
    %v292 = vadd.f32 %v274, %v286
    %v293 = vadd.f32 %v275, %v286
    %v294 = vadd.f32 %v276, %v286
    %v295 = vadd.f32 %v277, %v286
    %v296 = vmax.f32 %v288, 0.0
    %v297 = vmax.f32 %v289, 0.0
    %v298 = vmax.f32 %v290, 0.0
    %v299 = vmax.f32 %v291, 0.0
    %v300 = vmax.f32 %v292, 0.0
    %v301 = vmax.f32 %v293, 0.0
    %v302 = vmax.f32 %v294, 0.0
    %v303 = vmax.f32 %v295, 0.0
    %v304 = vld [vmem:[%s1] sm:$0xf]
    %v305 = vld [vmem:[%s2] sm:$0xf]
    %vm306 = vcmp.ge.s32.totalorder %v304, 1
    %v307 = vsel %vm306, 1.0, 0.0
    %vm308 = vcmp.lt.s32.totalorder %v304, 15
    %v309 = vsel %vm308, 1.0, 0.0
    %vm310 = vcmp.ge.s32.totalorder %v305, 1
    %v311 = vsel %vm310, 1.0, 0.0
    %vm312 = vcmp.lt.s32.totalorder %v305, 15
    %v313 = vsel %vm312, 1.0, 0.0
    %314 = vrot.lane.b32.xlu0 %v296, 17
    %v315 = vpop.permute.xlu0 %314
    %316 = vrot.lane.b32.xlu0 %v300, 17
    %v317 = vpop.permute.xlu0 %316
    %318 = vrot.lane.b32.xlu0 %v297, 17
    %v319 = vpop.permute.xlu0 %318
    %320 = vrot.lane.b32.xlu0 %v301, 17
    %v321 = vpop.permute.xlu0 %320
    %322 = vrot.lane.b32.xlu0 %v298, 17
    %v323 = vpop.permute.xlu0 %322
    %324 = vrot.lane.b32.xlu0 %v302, 17
    %v325 = vpop.permute.xlu0 %324
    %326 = vrot.lane.b32.xlu0 %v299, 17
    %v327 = vpop.permute.xlu0 %326
    %328 = vrot.lane.b32.xlu0 %v303, 17
    %v329 = vpop.permute.xlu0 %328
    %v330 = vlaneseq
    %v331 = vand.u32 %v330, 127
    %vm332 = vcmp.lt.s32.totalorder %v331, 17
    %v333 = vsel %vm332, %v323, %v327
    %v334 = vsel %vm332, %v325, %v329
    %v335 = vsel %vm332, %v319, %v323
    %v336 = vsel %vm332, %v321, %v325
    %v337 = vsel %vm332, %v315, %v319
    %v338 = vsel %vm332, %v317, %v321
    %v339 = vsel %vm332, %v327, %v315
    %v340 = vsel %vm332, %v329, %v317
    %v341 = vmul.f32 %v307, %v311
    %v343 = vlaneseq
    %v344 = vshrl.u32 %v343, 7
    %v345 = vsub.s32 0, %v344
    %v346 = vrot.slane %v341, %v345
    %v347 = vlaneseq
    %v348 = vshrl.u32 %v347, 7
    %v349 = vsub.s32 1, %v348
    %v350 = vrot.slane %v341, %v349
    %v351 = vlaneseq
    %v352 = vshrl.u32 %v351, 7
    %v353 = vsub.s32 2, %v352
    %v354 = vrot.slane %v341, %v353
    %v355 = vlaneseq
    %v356 = vshrl.u32 %v355, 7
    %v357 = vsub.s32 3, %v356
    %v358 = vrot.slane %v341, %v357
    %v363 = vmul.f32 %v339, %v346
    %v364 = vmul.f32 %v337, %v350
    %v365 = vmul.f32 %v335, %v354
    %v366 = vmul.f32 %v333, %v358
    %v367 = vmul.f32 %v340, %v346
    %v368 = vmul.f32 %v338, %v350
    %v369 = vmul.f32 %v336, %v354
    %v370 = vmul.f32 %v334, %v358
    %371 = vst [vmem:[#allocation2] sm:$0xff] %v363
    %372 = vst [vmem:[#allocation2 + $0x8] sm:$0xff] %v364
    %373 = vst [vmem:[#allocation2 + $0x10] sm:$0xff] %v365
    %374 = vst [vmem:[#allocation2 + $0x18] sm:$0xff] %v366
    %375 = vst [vmem:[#allocation2 + $0x20] sm:$0xff] %v367
    %376 = vst [vmem:[#allocation2 + $0x28] sm:$0xff] %v368
    %377 = vst [vmem:[#allocation2 + $0x30] sm:$0xff] %v369
    %378 = vst [vmem:[#allocation2 + $0x38] sm:$0xff] %v370
    %379 = vrot.lane.b32.xlu0 %v296, 16
    %v380 = vpop.permute.xlu0 %379
    %381 = vrot.lane.b32.xlu0 %v300, 16
    %v382 = vpop.permute.xlu0 %381
    %383 = vrot.lane.b32.xlu0 %v297, 16
    %v384 = vpop.permute.xlu0 %383
    %385 = vrot.lane.b32.xlu0 %v301, 16
    %v386 = vpop.permute.xlu0 %385
    %387 = vrot.lane.b32.xlu0 %v298, 16
    %v388 = vpop.permute.xlu0 %387
    %389 = vrot.lane.b32.xlu0 %v302, 16
    %v390 = vpop.permute.xlu0 %389
    %391 = vrot.lane.b32.xlu0 %v299, 16
    %v392 = vpop.permute.xlu0 %391
    %393 = vrot.lane.b32.xlu0 %v303, 16
    %v394 = vpop.permute.xlu0 %393
    %vm395 = vcmp.lt.s32.totalorder %v331, 16
    %v396 = vsel %vm395, %v388, %v392
    %v397 = vsel %vm395, %v390, %v394
    %v398 = vsel %vm395, %v384, %v388
    %v399 = vsel %vm395, %v386, %v390
    %v400 = vsel %vm395, %v380, %v384
    %v401 = vsel %vm395, %v382, %v386
    %v402 = vsel %vm395, %v392, %v380
    %v403 = vsel %vm395, %v394, %v382
    %v405 = vlaneseq
    %v406 = vshrl.u32 %v405, 7
    %v407 = vsub.s32 0, %v406
    %v408 = vrot.slane %v307, %v407
    %v409 = vlaneseq
    %v410 = vshrl.u32 %v409, 7
    %v411 = vsub.s32 1, %v410
    %v412 = vrot.slane %v307, %v411
    %v413 = vlaneseq
    %v414 = vshrl.u32 %v413, 7
    %v415 = vsub.s32 2, %v414
    %v416 = vrot.slane %v307, %v415
    %v417 = vlaneseq
    %v418 = vshrl.u32 %v417, 7
    %v419 = vsub.s32 3, %v418
    %v420 = vrot.slane %v307, %v419
    %v425 = vmul.f32 %v402, %v408
    %v426 = vmul.f32 %v400, %v412
    %v427 = vmul.f32 %v398, %v416
    %v428 = vmul.f32 %v396, %v420
    %v429 = vmul.f32 %v403, %v408
    %v430 = vmul.f32 %v401, %v412
    %v431 = vmul.f32 %v399, %v416
    %v432 = vmul.f32 %v397, %v420
    %433 = vst [vmem:[#allocation2 + $0x40] sm:$0xff] %v425
    %434 = vst [vmem:[#allocation2 + $0x48] sm:$0xff] %v426
    %435 = vst [vmem:[#allocation2 + $0x50] sm:$0xff] %v427
    %436 = vst [vmem:[#allocation2 + $0x58] sm:$0xff] %v428
    %437 = vst [vmem:[#allocation2 + $0x60] sm:$0xff] %v429
    %438 = vst [vmem:[#allocation2 + $0x68] sm:$0xff] %v430
    %439 = vst [vmem:[#allocation2 + $0x70] sm:$0xff] %v431
    %440 = vst [vmem:[#allocation2 + $0x78] sm:$0xff] %v432
    %441 = vrot.lane.b32.xlu0 %v296, 15
    %v442 = vpop.permute.xlu0 %441
    %443 = vrot.lane.b32.xlu0 %v300, 15
    %v444 = vpop.permute.xlu0 %443
    %445 = vrot.lane.b32.xlu0 %v297, 15
    %v446 = vpop.permute.xlu0 %445
    %447 = vrot.lane.b32.xlu0 %v301, 15
    %v448 = vpop.permute.xlu0 %447
    %449 = vrot.lane.b32.xlu0 %v298, 15
    %v450 = vpop.permute.xlu0 %449
    %451 = vrot.lane.b32.xlu0 %v302, 15
    %v452 = vpop.permute.xlu0 %451
    %453 = vrot.lane.b32.xlu0 %v299, 15
    %v454 = vpop.permute.xlu0 %453
    %455 = vrot.lane.b32.xlu0 %v303, 15
    %v456 = vpop.permute.xlu0 %455
    %vm457 = vcmp.lt.s32.totalorder %v331, 15
    %v458 = vsel %vm457, %v450, %v454
    %v459 = vsel %vm457, %v452, %v456
    %v460 = vsel %vm457, %v446, %v450
    %v461 = vsel %vm457, %v448, %v452
    %v462 = vsel %vm457, %v442, %v446
    %v463 = vsel %vm457, %v444, %v448
    %v464 = vsel %vm457, %v454, %v442
    %v465 = vsel %vm457, %v456, %v444
    %v466 = vmul.f32 %v307, %v313
    %v468 = vlaneseq
    %v469 = vshrl.u32 %v468, 7
    %v470 = vsub.s32 0, %v469
    %v471 = vrot.slane %v466, %v470
    %v472 = vlaneseq
    %v473 = vshrl.u32 %v472, 7
    %v474 = vsub.s32 1, %v473
    %v475 = vrot.slane %v466, %v474
    %v476 = vlaneseq
    %v477 = vshrl.u32 %v476, 7
    %v478 = vsub.s32 2, %v477
    %v479 = vrot.slane %v466, %v478
    %v480 = vlaneseq
    %v481 = vshrl.u32 %v480, 7
    %v482 = vsub.s32 3, %v481
    %v483 = vrot.slane %v466, %v482
    %v488 = vmul.f32 %v464, %v471
    %v489 = vmul.f32 %v462, %v475
    %v490 = vmul.f32 %v460, %v479
    %v491 = vmul.f32 %v458, %v483
    %v492 = vmul.f32 %v465, %v471
    %v493 = vmul.f32 %v463, %v475
    %v494 = vmul.f32 %v461, %v479
    %v495 = vmul.f32 %v459, %v483
    %496 = vst [vmem:[#allocation2 + $0x80] sm:$0xff] %v488
    %497 = vst [vmem:[#allocation2 + $0x88] sm:$0xff] %v489
    %498 = vst [vmem:[#allocation2 + $0x90] sm:$0xff] %v490
    %499 = vst [vmem:[#allocation2 + $0x98] sm:$0xff] %v491
    %500 = vst [vmem:[#allocation2 + $0xa0] sm:$0xff] %v492
    %501 = vst [vmem:[#allocation2 + $0xa8] sm:$0xff] %v493
    %502 = vst [vmem:[#allocation2 + $0xb0] sm:$0xff] %v494
    %503 = vst [vmem:[#allocation2 + $0xb8] sm:$0xff] %v495
    %504 = vrot.lane.b32.xlu0 %v296, 1
    %v505 = vpop.permute.xlu0 %504
    %506 = vrot.lane.b32.xlu0 %v300, 1
    %v507 = vpop.permute.xlu0 %506
    %508 = vrot.lane.b32.xlu0 %v297, 1
    %v509 = vpop.permute.xlu0 %508
    %510 = vrot.lane.b32.xlu0 %v301, 1
    %v511 = vpop.permute.xlu0 %510
    %512 = vrot.lane.b32.xlu0 %v298, 1
    %v513 = vpop.permute.xlu0 %512
    %514 = vrot.lane.b32.xlu0 %v302, 1
    %v515 = vpop.permute.xlu0 %514
    %516 = vrot.lane.b32.xlu0 %v299, 1
    %v517 = vpop.permute.xlu0 %516
    %518 = vrot.lane.b32.xlu0 %v303, 1
    %v519 = vpop.permute.xlu0 %518
    %vm520 = vcmp.lt.s32.totalorder %v331, 1
    %v521 = vsel %vm520, %v513, %v517
    %v522 = vsel %vm520, %v515, %v519
    %v523 = vsel %vm520, %v509, %v513
    %v524 = vsel %vm520, %v511, %v515
    %v525 = vsel %vm520, %v505, %v509
    %v526 = vsel %vm520, %v507, %v511
    %v527 = vsel %vm520, %v517, %v505
    %v528 = vsel %vm520, %v519, %v507
    %v530 = vlaneseq
    %v531 = vshrl.u32 %v530, 7
    %v532 = vsub.s32 0, %v531
    %v533 = vrot.slane %v311, %v532
    %v534 = vlaneseq
    %v535 = vshrl.u32 %v534, 7
    %v536 = vsub.s32 1, %v535
    %v537 = vrot.slane %v311, %v536
    %v538 = vlaneseq
    %v539 = vshrl.u32 %v538, 7
    %v540 = vsub.s32 2, %v539
    %v541 = vrot.slane %v311, %v540
    %v542 = vlaneseq
    %v543 = vshrl.u32 %v542, 7
    %v544 = vsub.s32 3, %v543
    %v545 = vrot.slane %v311, %v544
    %v550 = vmul.f32 %v527, %v533
    %v551 = vmul.f32 %v525, %v537
    %v552 = vmul.f32 %v523, %v541
    %v553 = vmul.f32 %v521, %v545
    %v554 = vmul.f32 %v528, %v533
    %v555 = vmul.f32 %v526, %v537
    %v556 = vmul.f32 %v524, %v541
    %v557 = vmul.f32 %v522, %v545
    %558 = vst [vmem:[#allocation2 + $0xc0] sm:$0xff] %v550
    %559 = vst [vmem:[#allocation2 + $0xc8] sm:$0xff] %v551
    %560 = vst [vmem:[#allocation2 + $0xd0] sm:$0xff] %v552
    %561 = vst [vmem:[#allocation2 + $0xd8] sm:$0xff] %v553
    %562 = vst [vmem:[#allocation2 + $0xe0] sm:$0xff] %v554
    %563 = vst [vmem:[#allocation2 + $0xe8] sm:$0xff] %v555
    %564 = vst [vmem:[#allocation2 + $0xf0] sm:$0xff] %v556
    %565 = vst [vmem:[#allocation2 + $0xf8] sm:$0xff] %v557
    %566 = vst [vmem:[#allocation2 + $0x100] sm:$0xff] %v296
    %567 = vst [vmem:[#allocation2 + $0x108] sm:$0xff] %v297
    %568 = vst [vmem:[#allocation2 + $0x110] sm:$0xff] %v298
    %569 = vst [vmem:[#allocation2 + $0x118] sm:$0xff] %v299
    %570 = vst [vmem:[#allocation2 + $0x120] sm:$0xff] %v300
    %571 = vst [vmem:[#allocation2 + $0x128] sm:$0xff] %v301
    %572 = vst [vmem:[#allocation2 + $0x130] sm:$0xff] %v302
    %573 = vst [vmem:[#allocation2 + $0x138] sm:$0xff] %v303
    %574 = vrot.lane.b32.xlu0 %v296, 127
    %v575 = vpop.permute.xlu0 %574
    %576 = vrot.lane.b32.xlu0 %v300, 127
    %v577 = vpop.permute.xlu0 %576
    %578 = vrot.lane.b32.xlu0 %v297, 127
    %v579 = vpop.permute.xlu0 %578
    %580 = vrot.lane.b32.xlu0 %v301, 127
    %v581 = vpop.permute.xlu0 %580
    %582 = vrot.lane.b32.xlu0 %v298, 127
    %v583 = vpop.permute.xlu0 %582
    %584 = vrot.lane.b32.xlu0 %v302, 127
    %v585 = vpop.permute.xlu0 %584
    %586 = vrot.lane.b32.xlu0 %v299, 127
    %v587 = vpop.permute.xlu0 %586
    %588 = vrot.lane.b32.xlu0 %v303, 127
    %v589 = vpop.permute.xlu0 %588
    %vm590 = vcmp.lt.s32.totalorder %v331, 127
    %v591 = vsel %vm590, %v583, %v587
    %v592 = vsel %vm590, %v585, %v589
    %v593 = vsel %vm590, %v579, %v583
    %v594 = vsel %vm590, %v581, %v585
    %v595 = vsel %vm590, %v575, %v579
    %v596 = vsel %vm590, %v577, %v581
    %v597 = vsel %vm590, %v587, %v575
    %v598 = vsel %vm590, %v589, %v577
    %v600 = vlaneseq
    %v601 = vshrl.u32 %v600, 7
    %v602 = vsub.s32 0, %v601
    %v603 = vrot.slane %v313, %v602
    %v604 = vlaneseq
    %v605 = vshrl.u32 %v604, 7
    %v606 = vsub.s32 1, %v605
    %v607 = vrot.slane %v313, %v606
    %v608 = vlaneseq
    %v609 = vshrl.u32 %v608, 7
    %v610 = vsub.s32 2, %v609
    %v611 = vrot.slane %v313, %v610
    %v612 = vlaneseq
    %v613 = vshrl.u32 %v612, 7
    %v614 = vsub.s32 3, %v613
    %v615 = vrot.slane %v313, %v614
    %v620 = vmul.f32 %v595, %v603
    %v621 = vmul.f32 %v593, %v607
    %v622 = vmul.f32 %v591, %v611
    %v623 = vmul.f32 %v597, %v615
    %v624 = vmul.f32 %v596, %v603
    %v625 = vmul.f32 %v594, %v607
    %v626 = vmul.f32 %v592, %v611
    %v627 = vmul.f32 %v598, %v615
    %628 = vst [vmem:[#allocation2 + $0x140] sm:$0xff] %v620
    %629 = vst [vmem:[#allocation2 + $0x148] sm:$0xff] %v621
    %630 = vst [vmem:[#allocation2 + $0x150] sm:$0xff] %v622
    %631 = vst [vmem:[#allocation2 + $0x158] sm:$0xff] %v623
    %632 = vst [vmem:[#allocation2 + $0x160] sm:$0xff] %v624
    %633 = vst [vmem:[#allocation2 + $0x168] sm:$0xff] %v625
    %634 = vst [vmem:[#allocation2 + $0x170] sm:$0xff] %v626
    %635 = vst [vmem:[#allocation2 + $0x178] sm:$0xff] %v627
    %636 = vrot.lane.b32.xlu0 %v296, 113
    %v637 = vpop.permute.xlu0 %636
    %638 = vrot.lane.b32.xlu0 %v300, 113
    %v639 = vpop.permute.xlu0 %638
    %640 = vrot.lane.b32.xlu0 %v297, 113
    %v641 = vpop.permute.xlu0 %640
    %642 = vrot.lane.b32.xlu0 %v301, 113
    %v643 = vpop.permute.xlu0 %642
    %644 = vrot.lane.b32.xlu0 %v298, 113
    %v645 = vpop.permute.xlu0 %644
    %646 = vrot.lane.b32.xlu0 %v302, 113
    %v647 = vpop.permute.xlu0 %646
    %648 = vrot.lane.b32.xlu0 %v299, 113
    %v649 = vpop.permute.xlu0 %648
    %650 = vrot.lane.b32.xlu0 %v303, 113
    %v651 = vpop.permute.xlu0 %650
    %vm652 = vcmp.lt.s32.totalorder %v331, 113
    %v653 = vsel %vm652, %v645, %v649
    %v654 = vsel %vm652, %v647, %v651
    %v655 = vsel %vm652, %v641, %v645
    %v656 = vsel %vm652, %v643, %v647
    %v657 = vsel %vm652, %v637, %v641
    %v658 = vsel %vm652, %v639, %v643
    %v659 = vsel %vm652, %v649, %v637
    %v660 = vsel %vm652, %v651, %v639
    %v661 = vmul.f32 %v309, %v311
    %v663 = vlaneseq
    %v664 = vshrl.u32 %v663, 7
    %v665 = vsub.s32 0, %v664
    %v666 = vrot.slane %v661, %v665
    %v667 = vlaneseq
    %v668 = vshrl.u32 %v667, 7
    %v669 = vsub.s32 1, %v668
    %v670 = vrot.slane %v661, %v669
    %v671 = vlaneseq
    %v672 = vshrl.u32 %v671, 7
    %v673 = vsub.s32 2, %v672
    %v674 = vrot.slane %v661, %v673
    %v675 = vlaneseq
    %v676 = vshrl.u32 %v675, 7
    %v677 = vsub.s32 3, %v676
    %v678 = vrot.slane %v661, %v677
    %v683 = vmul.f32 %v657, %v666
    %v684 = vmul.f32 %v655, %v670
    %v685 = vmul.f32 %v653, %v674
    %v686 = vmul.f32 %v659, %v678
    %v687 = vmul.f32 %v658, %v666
    %v688 = vmul.f32 %v656, %v670
    %v689 = vmul.f32 %v654, %v674
    %v690 = vmul.f32 %v660, %v678
    %691 = vst [vmem:[#allocation2 + $0x180] sm:$0xff] %v683
    %692 = vst [vmem:[#allocation2 + $0x188] sm:$0xff] %v684
    %693 = vst [vmem:[#allocation2 + $0x190] sm:$0xff] %v685
    %694 = vst [vmem:[#allocation2 + $0x198] sm:$0xff] %v686
    %695 = vst [vmem:[#allocation2 + $0x1a0] sm:$0xff] %v687
    %696 = vst [vmem:[#allocation2 + $0x1a8] sm:$0xff] %v688
    %697 = vst [vmem:[#allocation2 + $0x1b0] sm:$0xff] %v689
    %698 = vst [vmem:[#allocation2 + $0x1b8] sm:$0xff] %v690
    %699 = vrot.lane.b32.xlu0 %v296, 112
    %v700 = vpop.permute.xlu0 %699
    %701 = vrot.lane.b32.xlu0 %v300, 112
    %v702 = vpop.permute.xlu0 %701
    %703 = vrot.lane.b32.xlu0 %v297, 112
    %v704 = vpop.permute.xlu0 %703
    %705 = vrot.lane.b32.xlu0 %v301, 112
    %v706 = vpop.permute.xlu0 %705
    %707 = vrot.lane.b32.xlu0 %v298, 112
    %v708 = vpop.permute.xlu0 %707
    %709 = vrot.lane.b32.xlu0 %v302, 112
    %v710 = vpop.permute.xlu0 %709
    %711 = vrot.lane.b32.xlu0 %v299, 112
    %v712 = vpop.permute.xlu0 %711
    %713 = vrot.lane.b32.xlu0 %v303, 112
    %v714 = vpop.permute.xlu0 %713
    %vm715 = vcmp.lt.s32.totalorder %v331, 112
    %v716 = vsel %vm715, %v708, %v712
    %v717 = vsel %vm715, %v710, %v714
    %v718 = vsel %vm715, %v704, %v708
    %v719 = vsel %vm715, %v706, %v710
    %v720 = vsel %vm715, %v700, %v704
    %v721 = vsel %vm715, %v702, %v706
    %v722 = vsel %vm715, %v712, %v700
    %v723 = vsel %vm715, %v714, %v702
    %v725 = vlaneseq
    %v726 = vshrl.u32 %v725, 7
    %v727 = vsub.s32 0, %v726
    %v728 = vrot.slane %v309, %v727
    %v729 = vlaneseq
    %v730 = vshrl.u32 %v729, 7
    %v731 = vsub.s32 1, %v730
    %v732 = vrot.slane %v309, %v731
    %v733 = vlaneseq
    %v734 = vshrl.u32 %v733, 7
    %v735 = vsub.s32 2, %v734
    %v736 = vrot.slane %v309, %v735
    %v737 = vlaneseq
    %v738 = vshrl.u32 %v737, 7
    %v739 = vsub.s32 3, %v738
    %v740 = vrot.slane %v309, %v739
    %v745 = vmul.f32 %v720, %v728
    %v746 = vmul.f32 %v718, %v732
    %v747 = vmul.f32 %v716, %v736
    %v748 = vmul.f32 %v722, %v740
    %v749 = vmul.f32 %v721, %v728
    %v750 = vmul.f32 %v719, %v732
    %v751 = vmul.f32 %v717, %v736
    %v752 = vmul.f32 %v723, %v740
    %753 = vst [vmem:[#allocation2 + $0x1c0] sm:$0xff] %v745
    %754 = vst [vmem:[#allocation2 + $0x1c8] sm:$0xff] %v746
    %755 = vst [vmem:[#allocation2 + $0x1d0] sm:$0xff] %v747
    %756 = vst [vmem:[#allocation2 + $0x1d8] sm:$0xff] %v748
    %757 = vst [vmem:[#allocation2 + $0x1e0] sm:$0xff] %v749
    %758 = vst [vmem:[#allocation2 + $0x1e8] sm:$0xff] %v750
    %759 = vst [vmem:[#allocation2 + $0x1f0] sm:$0xff] %v751
    %760 = vst [vmem:[#allocation2 + $0x1f8] sm:$0xff] %v752
    %761 = vrot.lane.b32.xlu0 %v296, 111
    %v762 = vpop.permute.xlu0 %761
    %763 = vrot.lane.b32.xlu0 %v300, 111
    %v764 = vpop.permute.xlu0 %763
    %765 = vrot.lane.b32.xlu0 %v297, 111
    %v766 = vpop.permute.xlu0 %765
    %767 = vrot.lane.b32.xlu0 %v301, 111
    %v768 = vpop.permute.xlu0 %767
    %769 = vrot.lane.b32.xlu0 %v298, 111
    %v770 = vpop.permute.xlu0 %769
    %771 = vrot.lane.b32.xlu0 %v302, 111
    %v772 = vpop.permute.xlu0 %771
    %773 = vrot.lane.b32.xlu0 %v299, 111
    %v774 = vpop.permute.xlu0 %773
    %775 = vrot.lane.b32.xlu0 %v303, 111
    %v776 = vpop.permute.xlu0 %775
    %vm777 = vcmp.lt.s32.totalorder %v331, 111
    %v778 = vsel %vm777, %v770, %v774
    %v779 = vsel %vm777, %v772, %v776
    %v780 = vsel %vm777, %v766, %v770
    %v781 = vsel %vm777, %v768, %v772
    %v782 = vsel %vm777, %v762, %v766
    %v783 = vsel %vm777, %v764, %v768
    %v784 = vsel %vm777, %v774, %v762
    %v785 = vsel %vm777, %v776, %v764
    %v786 = vmul.f32 %v309, %v313
    %v788 = vlaneseq
    %v789 = vshrl.u32 %v788, 7
    %v790 = vsub.s32 0, %v789
    %v791 = vrot.slane %v786, %v790
    %v792 = vlaneseq
    %v793 = vshrl.u32 %v792, 7
    %v794 = vsub.s32 1, %v793
    %v795 = vrot.slane %v786, %v794
    %v796 = vlaneseq
    %v797 = vshrl.u32 %v796, 7
    %v798 = vsub.s32 2, %v797
    %v799 = vrot.slane %v786, %v798
    %v800 = vlaneseq
    %v801 = vshrl.u32 %v800, 7
    %v802 = vsub.s32 3, %v801
    %v803 = vrot.slane %v786, %v802
    %v808 = vmul.f32 %v782, %v791
    %v809 = vmul.f32 %v780, %v795
    %v810 = vmul.f32 %v778, %v799
    %v811 = vmul.f32 %v784, %v803
    %v812 = vmul.f32 %v783, %v791
    %v813 = vmul.f32 %v781, %v795
    %v814 = vmul.f32 %v779, %v799
    %v815 = vmul.f32 %v785, %v803
    %816 = vst [vmem:[#allocation2 + $0x200] sm:$0xff] %v808
    %817 = vst [vmem:[#allocation2 + $0x208] sm:$0xff] %v809
    %818 = vst [vmem:[#allocation2 + $0x210] sm:$0xff] %v810
    %819 = vst [vmem:[#allocation2 + $0x218] sm:$0xff] %v811
    %820 = vst [vmem:[#allocation2 + $0x220] sm:$0xff] %v812
    %821 = vst [vmem:[#allocation2 + $0x228] sm:$0xff] %v813
    %822 = vst [vmem:[#allocation2 + $0x230] sm:$0xff] %v814
    %823 = vst [vmem:[#allocation2 + $0x238] sm:$0xff] %v815
    %v824 = vld [vmem:[%s6] sm:$0xff]
    %v825 = vld [vmem:[%s6 + $0x8] sm:$0xff]
    %v826 = vld [vmem:[%s6 + $0x10] sm:$0xff]
    %v827 = vld [vmem:[%s6 + $0x18] sm:$0xff]
    %v828 = vld [vmem:[#allocation2] sm:$0xff]
    %v829 = vld [vmem:[#allocation2 + $0x8] sm:$0xff]
    %v830 = vld [vmem:[#allocation2 + $0x10] sm:$0xff]
    %v831 = vld [vmem:[#allocation2 + $0x18] sm:$0xff]
    %v832 = vld [vmem:[#allocation2 + $0x20] sm:$0xff]
    %v833 = vld [vmem:[#allocation2 + $0x28] sm:$0xff]
    %v834 = vld [vmem:[#allocation2 + $0x30] sm:$0xff]
    %v835 = vld [vmem:[#allocation2 + $0x38] sm:$0xff]
    %v836 = vld [vmem:[#allocation2 + $0x40] sm:$0xff]
    %v837 = vld [vmem:[#allocation2 + $0x48] sm:$0xff]
    %v838 = vld [vmem:[#allocation2 + $0x50] sm:$0xff]
    %v839 = vld [vmem:[#allocation2 + $0x58] sm:$0xff]
    %v840 = vld [vmem:[#allocation2 + $0x60] sm:$0xff]
    %v841 = vld [vmem:[#allocation2 + $0x68] sm:$0xff]
    %v842 = vld [vmem:[#allocation2 + $0x70] sm:$0xff]
    %v843 = vld [vmem:[#allocation2 + $0x78] sm:$0xff]
    %v844 = vld [vmem:[#allocation2 + $0x80] sm:$0xff]
    %v845 = vld [vmem:[#allocation2 + $0x88] sm:$0xff]
    %v846 = vld [vmem:[#allocation2 + $0x90] sm:$0xff]
    %v847 = vld [vmem:[#allocation2 + $0x98] sm:$0xff]
    %v848 = vld [vmem:[#allocation2 + $0xa0] sm:$0xff]
    %v849 = vld [vmem:[#allocation2 + $0xa8] sm:$0xff]
    %v850 = vld [vmem:[#allocation2 + $0xb0] sm:$0xff]
    %v851 = vld [vmem:[#allocation2 + $0xb8] sm:$0xff]
    %v852 = vld [vmem:[#allocation2 + $0xc0] sm:$0xff]
    %v853 = vld [vmem:[#allocation2 + $0xc8] sm:$0xff]
    %v854 = vld [vmem:[#allocation2 + $0xd0] sm:$0xff]
    %v855 = vld [vmem:[#allocation2 + $0xd8] sm:$0xff]
    %v856 = vld [vmem:[#allocation2 + $0xe0] sm:$0xff]
    %v857 = vld [vmem:[#allocation2 + $0xe8] sm:$0xff]
    %v858 = vld [vmem:[#allocation2 + $0xf0] sm:$0xff]
    %v859 = vld [vmem:[#allocation2 + $0xf8] sm:$0xff]
    %v860 = vld [vmem:[#allocation2 + $0x100] sm:$0xff]
    %v861 = vld [vmem:[#allocation2 + $0x108] sm:$0xff]
    %v862 = vld [vmem:[#allocation2 + $0x110] sm:$0xff]
    %v863 = vld [vmem:[#allocation2 + $0x118] sm:$0xff]
    %v864 = vld [vmem:[#allocation2 + $0x120] sm:$0xff]
    %v865 = vld [vmem:[#allocation2 + $0x128] sm:$0xff]
    %v866 = vld [vmem:[#allocation2 + $0x130] sm:$0xff]
    %v867 = vld [vmem:[#allocation2 + $0x138] sm:$0xff]
    %v868 = vld [vmem:[#allocation2 + $0x140] sm:$0xff]
    %v869 = vld [vmem:[#allocation2 + $0x148] sm:$0xff]
    %v870 = vld [vmem:[#allocation2 + $0x150] sm:$0xff]
    %v871 = vld [vmem:[#allocation2 + $0x158] sm:$0xff]
    %v872 = vld [vmem:[#allocation2 + $0x160] sm:$0xff]
    %v873 = vld [vmem:[#allocation2 + $0x168] sm:$0xff]
    %v874 = vld [vmem:[#allocation2 + $0x170] sm:$0xff]
    %v875 = vld [vmem:[#allocation2 + $0x178] sm:$0xff]
    %v876 = vld [vmem:[#allocation2 + $0x180] sm:$0xff]
    %v877 = vld [vmem:[#allocation2 + $0x188] sm:$0xff]
    %v878 = vld [vmem:[#allocation2 + $0x190] sm:$0xff]
    %v879 = vld [vmem:[#allocation2 + $0x198] sm:$0xff]
    %v880 = vld [vmem:[#allocation2 + $0x1a0] sm:$0xff]
    %v881 = vld [vmem:[#allocation2 + $0x1a8] sm:$0xff]
    %v882 = vld [vmem:[#allocation2 + $0x1b0] sm:$0xff]
    %v883 = vld [vmem:[#allocation2 + $0x1b8] sm:$0xff]
    %v884 = vld [vmem:[#allocation2 + $0x1c0] sm:$0xff]
    %v885 = vld [vmem:[#allocation2 + $0x1c8] sm:$0xff]
    %v886 = vld [vmem:[#allocation2 + $0x1d0] sm:$0xff]
    %v887 = vld [vmem:[#allocation2 + $0x1d8] sm:$0xff]
    %v888 = vld [vmem:[#allocation2 + $0x1e0] sm:$0xff]
    %v889 = vld [vmem:[#allocation2 + $0x1e8] sm:$0xff]
    %v890 = vld [vmem:[#allocation2 + $0x1f0] sm:$0xff]
    %v891 = vld [vmem:[#allocation2 + $0x1f8] sm:$0xff]
    %v892 = vld [vmem:[#allocation2 + $0x200] sm:$0xff]
    %v893 = vld [vmem:[#allocation2 + $0x208] sm:$0xff]
    %v894 = vld [vmem:[#allocation2 + $0x210] sm:$0xff]
    %v895 = vld [vmem:[#allocation2 + $0x218] sm:$0xff]
    %v896 = vld [vmem:[#allocation2 + $0x220] sm:$0xff]
    %v897 = vld [vmem:[#allocation2 + $0x228] sm:$0xff]
    %v898 = vld [vmem:[#allocation2 + $0x230] sm:$0xff]
    %v899 = vld [vmem:[#allocation2 + $0x238] sm:$0xff]
    %vm900 = vcmask 130048
    %v902 = vsel %vm900, %v825, 0
    %v905 = vsel %vm900, %v827, 0
    %907 = vmatprep.subr.mxu0 %v829
    %908 = vmatpush1.msra.mxu0 %v828
    %909 = vmatprep.subr.mxu0 %v833
    %910 = vmatpush1.msra.mxu0 %v832
    %911 = vmatprep.subr.mxu0 %v837
    %912 = vmatpush1.msra.mxu0 %v836
    %913 = vmatprep.subr.mxu0 %v841
    %914 = vmatpush1.msra.mxu0 %v840
    %915 = vmatprep.subr.mxu0 %v845
    %916 = vmatpush1.msra.mxu0 %v844
    %917 = vmatprep.subr.mxu0 %v849
    %918 = vmatpush1.msra.mxu0 %v848
    %919 = vmatprep.subr.mxu0 %v853
    %920 = vmatpush1.msra.mxu0 %v852
    %921 = vmatprep.subr.mxu0 %v857
    %922 = vmatpush1.msra.mxu0 %v856
    %923 = vmatprep.subr.mxu0 %v861
    %924 = vmatpush1.msra.mxu0 %v860
    %925 = vmatprep.subr.mxu0 %v865
    %926 = vmatpush1.msra.mxu0 %v864
    %927 = vmatprep.subr.mxu0 %v869
    %928 = vmatpush1.msra.mxu0 %v868
    %929 = vmatprep.subr.mxu0 %v873
    %930 = vmatpush1.msra.mxu0 %v872
    %931 = vmatprep.subr.mxu0 %v877
    %932 = vmatpush1.msra.mxu0 %v876
    %933 = vmatprep.subr.mxu0 %v881
    %934 = vmatpush1.msra.mxu0 %v880
    %935 = vmatprep.subr.mxu0 %v885
    %936 = vmatpush1.msra.mxu0 %v884
    %937 = vmatprep.subr.mxu0 %v889
    %938 = vmatpush1.msra.mxu0 %v888
    %939 = vmatprep.subr.mxu0 %v893
    %940 = vmatpush1.msra.mxu0 %v892
    %941 = vmatprep.subr.mxu0 %v897
    %942 = vmatpush1.msra.mxu0 %v896
    %943 = vmatprep.subr.mxu0 0.0
    %944 = vmatpush1.msra.mxu0 0.0
    %945 = vmatprep.subr.mxu0 0.0
    %946 = vmatpush1.msra.mxu0 0.0
    %947 = vmatprep.subr.mxu0 0.0
    %948 = vmatpush1.msra.mxu0 0.0
    %949 = vmatprep.subr.mxu0 0.0
    %950 = vmatpush1.msra.mxu0 0.0
    %951 = vmatprep.subr.mxu0 0.0
    %952 = vmatpush1.msra.mxu0 0.0
    %953 = vmatprep.subr.mxu0 0.0
    %954 = vmatpush1.msra.mxu0 0.0
    %955 = vmatprep.subr.mxu0 0.0
    %956 = vmatpush1.msra.mxu0 0.0
    %957 = vmatprep.subr.mxu0 0.0
    %958 = vmatpush1.msra.mxu0 0.0
    %959 = vmatprep.subr.mxu0 0.0
    %960 = vmatpush1.msra.mxu0 0.0
    %961 = vmatprep.subr.mxu0 0.0
    %962 = vmatpush1.msra.mxu0 0.0
    %963 = vmatprep.subr.mxu0 0.0
    %964 = vmatpush1.msra.mxu0 0.0
    %965 = vmatprep.subr.mxu0 0.0
    %966 = vmatpush1.msra.mxu0 0.0
    %967 = vmatprep.subr.mxu0 0.0
    %968 = vmatpush1.msra.mxu0 0.0
    %969 = vmatprep.subr.mxu0 0.0
    %970 = vmatpush1.msra.mxu0 0.0
    %971 = vmatprep.mubr.f32.mxu0 %v902
    %972 = vmatmul.mubr.f32.gmra.mrb[0].mxu0 %v824
    %v973 = vpop.f32.mrb[0].mxu0
    %v974 = vadd.f32 0.0, %v973
    %v975 = vpop.f32.mrb[0].mxu0
    %v976 = vadd.f32 0.0, %v975
    %977 = vmatprep.mubr.f32.mxu0 %v905
    %978 = vmatmul.mubr.f32.gmra.mrb[0].mxu0 %v826
    %v979 = vpop.f32.mrb[0].mxu0
    %v980 = vadd.f32 0.0, %v979
    %v981 = vpop.f32.mrb[0].mxu0
    %v982 = vadd.f32 0.0, %v981
    %983 = vdwg.mxu0
    %984 = vmatprep.subr.mxu0 %v831
    %985 = vmatpush1.msra.mxu0 %v830
    %986 = vmatprep.subr.mxu0 %v835
    %987 = vmatpush1.msra.mxu0 %v834
    %988 = vmatprep.subr.mxu0 %v839
    %989 = vmatpush1.msra.mxu0 %v838
    %990 = vmatprep.subr.mxu0 %v843
    %991 = vmatpush1.msra.mxu0 %v842
    %992 = vmatprep.subr.mxu0 %v847
    %993 = vmatpush1.msra.mxu0 %v846
    %994 = vmatprep.subr.mxu0 %v851
    %995 = vmatpush1.msra.mxu0 %v850
    %996 = vmatprep.subr.mxu0 %v855
    %997 = vmatpush1.msra.mxu0 %v854
    %998 = vmatprep.subr.mxu0 %v859
    %999 = vmatpush1.msra.mxu0 %v858
    %1000 = vmatprep.subr.mxu0 %v863
    %1001 = vmatpush1.msra.mxu0 %v862
    %1002 = vmatprep.subr.mxu0 %v867
    %1003 = vmatpush1.msra.mxu0 %v866
    %1004 = vmatprep.subr.mxu0 %v871
    %1005 = vmatpush1.msra.mxu0 %v870
    %1006 = vmatprep.subr.mxu0 %v875
    %1007 = vmatpush1.msra.mxu0 %v874
    %1008 = vmatprep.subr.mxu0 %v879
    %1009 = vmatpush1.msra.mxu0 %v878
    %1010 = vmatprep.subr.mxu0 %v883
    %1011 = vmatpush1.msra.mxu0 %v882
    %1012 = vmatprep.subr.mxu0 %v887
    %1013 = vmatpush1.msra.mxu0 %v886
    %1014 = vmatprep.subr.mxu0 %v891
    %1015 = vmatpush1.msra.mxu0 %v890
    %1016 = vmatprep.subr.mxu0 %v895
    %1017 = vmatpush1.msra.mxu0 %v894
    %1018 = vmatprep.subr.mxu0 %v899
    %1019 = vmatpush1.msra.mxu0 %v898
    %1020 = vmatprep.subr.mxu0 0.0
    %1021 = vmatpush1.msra.mxu0 0.0
    %1022 = vmatprep.subr.mxu0 0.0
    %1023 = vmatpush1.msra.mxu0 0.0
    %1024 = vmatprep.subr.mxu0 0.0
    %1025 = vmatpush1.msra.mxu0 0.0
    %1026 = vmatprep.subr.mxu0 0.0
    %1027 = vmatpush1.msra.mxu0 0.0
    %1028 = vmatprep.subr.mxu0 0.0
    %1029 = vmatpush1.msra.mxu0 0.0
    %1030 = vmatprep.subr.mxu0 0.0
    %1031 = vmatpush1.msra.mxu0 0.0
    %1032 = vmatprep.subr.mxu0 0.0
    %1033 = vmatpush1.msra.mxu0 0.0
    %1034 = vmatprep.subr.mxu0 0.0
    %1035 = vmatpush1.msra.mxu0 0.0
    %1036 = vmatprep.subr.mxu0 0.0
    %1037 = vmatpush1.msra.mxu0 0.0
    %1038 = vmatprep.subr.mxu0 0.0
    %1039 = vmatpush1.msra.mxu0 0.0
    %1040 = vmatprep.subr.mxu0 0.0
    %1041 = vmatpush1.msra.mxu0 0.0
    %1042 = vmatprep.subr.mxu0 0.0
    %1043 = vmatpush1.msra.mxu0 0.0
    %1044 = vmatprep.subr.mxu0 0.0
    %1045 = vmatpush1.msra.mxu0 0.0
    %1046 = vmatprep.subr.mxu0 0.0
    %1047 = vmatpush1.msra.mxu0 0.0
    %1048 = vmatprep.mubr.f32.mxu0 %v902
    %1049 = vmatmul.mubr.f32.gmra.mrb[0].mxu0 %v824
    %v1050 = vpop.f32.mrb[0].mxu0
    %v1051 = vadd.f32 0.0, %v1050
    %v1052 = vpop.f32.mrb[0].mxu0
    %v1053 = vadd.f32 0.0, %v1052
    %1054 = vmatprep.mubr.f32.mxu0 %v905
    %1055 = vmatmul.mubr.f32.gmra.mrb[0].mxu0 %v826
    %v1056 = vpop.f32.mrb[0].mxu0
    %v1057 = vadd.f32 0.0, %v1056
    %v1058 = vpop.f32.mrb[0].mxu0
    %v1059 = vadd.f32 0.0, %v1058
    %1060 = vdwg.mxu0
    %v1061 = vadd.f32 %v974, %v976
    %v1062 = vadd.f32 %v1061, %v1051
    %v1063 = vadd.f32 %v1062, %v1053
    %1064 = vadd.xlane.f32.xlu0 %v1063
    %v1065 = vpop.xlane.xlu0 %1064
    %v1066 = vadd.f32 %v980, %v982
    %v1067 = vadd.f32 %v1066, %v1057
    %v1068 = vadd.f32 %v1067, %v1059
    %1069 = vadd.xlane.f32.xlu0 %v1068
    %v1070 = vpop.xlane.xlu0 %1069
    %v1071 = vmul.f32 %v974, %v974
    %v1072 = vmul.f32 %v976, %v976
    %v1073 = vmul.f32 %v1051, %v1051
    %v1074 = vmul.f32 %v1053, %v1053
    %v1075 = vmul.f32 %v980, %v980
    %v1076 = vmul.f32 %v982, %v982
    %v1077 = vmul.f32 %v1057, %v1057
    %v1078 = vmul.f32 %v1059, %v1059
    %v1079 = vadd.f32 %v1071, %v1072
    %v1080 = vadd.f32 %v1079, %v1073
    %v1081 = vadd.f32 %v1080, %v1074
    %1082 = vadd.xlane.f32.xlu0 %v1081
    %v1083 = vpop.xlane.xlu0 %1082
    %v1084 = vadd.f32 %v1075, %v1076
    %v1085 = vadd.f32 %v1084, %v1077
    %v1086 = vadd.f32 %v1085, %v1078
    %1087 = vadd.xlane.f32.xlu0 %v1086
    %v1088 = vpop.xlane.xlu0 %1087
    %v1089 = vmul.f32 %v1065, %v237
    %v1090 = vmul.f32 %v1070, %v237
    %v1091 = vmul.f32 %v1083, %v237
    %v1092 = vmul.f32 %v1088, %v237
    %v1093 = vmul.f32 %v1089, %v1089
    %v1094 = vmul.f32 %v1090, %v1090
    %v1095 = vsub.f32 %v1091, %v1093
    %v1096 = vsub.f32 %v1092, %v1094
    %v1097 = vld [vmem:[%s7] sm:$0xff]
    %v1098 = vld [vmem:[%s7 + $0x8] sm:$0xff]
    %v1099 = vadd.f32 %v1095, 1e-05
    %v1100 = vadd.f32 %v1096, 1e-05
    %v1101 = vrsqrt.pop %v1099
    %v1102 = vrsqrt.pop %v1100
    %v1103 = vmul.f32 %v1097, %v1101
    %v1104 = vmul.f32 %v1098, %v1102
    %v1105 = vld [vmem:[%s8] sm:$0xff]
    %v1106 = vld [vmem:[%s8 + $0x8] sm:$0xff]
    %v1107 = vmul.f32 %v1089, %v1103
    %v1108 = vmul.f32 %v1090, %v1104
    %v1109 = vsub.f32 %v1105, %v1107
    %v1110 = vsub.f32 %v1106, %v1108
    %1112 = vset.pattern.permute.xlu0 0
    %1113 = vperm.xlu0 %1112, %v1103
    %v1114 = vpop.permute.xlu0 %1113
    %1117 = vset.pattern.permute.xlu0 0
    %1118 = vperm.xlu0 %1117, %v1104
    %v1119 = vpop.permute.xlu0 %1118
    %v1121 = vmul.f32 %v974, %v1114
    %v1122 = vmul.f32 %v976, %v1114
    %v1123 = vmul.f32 %v1051, %v1114
    %v1124 = vmul.f32 %v1053, %v1114
    %v1125 = vmul.f32 %v980, %v1119
    %v1126 = vmul.f32 %v982, %v1119
    %v1127 = vmul.f32 %v1057, %v1119
    %v1128 = vmul.f32 %v1059, %v1119
    %1130 = vset.pattern.permute.xlu0 0
    %1131 = vperm.xlu0 %1130, %v1109
    %v1132 = vpop.permute.xlu0 %1131
    %1135 = vset.pattern.permute.xlu0 0
    %1136 = vperm.xlu0 %1135, %v1110
    %v1137 = vpop.permute.xlu0 %1136
    %v1139 = vadd.f32 %v1121, %v1132
    %v1140 = vadd.f32 %v1122, %v1132
    %v1141 = vadd.f32 %v1123, %v1132
    %v1142 = vadd.f32 %v1124, %v1132
    %v1143 = vadd.f32 %v1125, %v1137
    %v1144 = vadd.f32 %v1126, %v1137
    %v1145 = vadd.f32 %v1127, %v1137
    %v1146 = vadd.f32 %v1128, %v1137
    %v1147 = vmax.f32 %v1139, 0.0
    %v1148 = vmax.f32 %v1140, 0.0
    %v1149 = vmax.f32 %v1141, 0.0
    %v1150 = vmax.f32 %v1142, 0.0
    %v1151 = vmax.f32 %v1143, 0.0
    %v1152 = vmax.f32 %v1144, 0.0
    %v1153 = vmax.f32 %v1145, 0.0
    %v1154 = vmax.f32 %v1146, 0.0
    %v1155 = vld [vmem:[%s9] sm:$0xff]
    %v1156 = vld [vmem:[%s9 + $0x8] sm:$0xff]
    %v1158 = vsel %vm900, %v1155, 0
    %v1161 = vsel %vm900, %v1156, 0
    %1163 = vmatprep.subr.mxu0 %v1148
    %1164 = vmatpush1.msra.mxu0 %v1147
    %1165 = vmatprep.subr.mxu0 %v1152
    %1166 = vmatpush1.msra.mxu0 %v1151
    %1167 = vmatprep.subr.mxu0 0.0
    %1168 = vmatpush1.msra.mxu0 0.0
    %1169 = vmatprep.subr.mxu0 0.0
    %1170 = vmatpush1.msra.mxu0 0.0
    %1171 = vmatprep.subr.mxu0 0.0
    %1172 = vmatpush1.msra.mxu0 0.0
    %1173 = vmatprep.subr.mxu0 0.0
    %1174 = vmatpush1.msra.mxu0 0.0
    %1175 = vmatprep.subr.mxu0 0.0
    %1176 = vmatpush1.msra.mxu0 0.0
    %1177 = vmatprep.subr.mxu0 0.0
    %1178 = vmatpush1.msra.mxu0 0.0
    %1179 = vmatprep.subr.mxu0 0.0
    %1180 = vmatpush1.msra.mxu0 0.0
    %1181 = vmatprep.subr.mxu0 0.0
    %1182 = vmatpush1.msra.mxu0 0.0
    %1183 = vmatprep.subr.mxu0 0.0
    %1184 = vmatpush1.msra.mxu0 0.0
    %1185 = vmatprep.subr.mxu0 0.0
    %1186 = vmatpush1.msra.mxu0 0.0
    %1187 = vmatprep.subr.mxu0 0.0
    %1188 = vmatpush1.msra.mxu0 0.0
    %1189 = vmatprep.subr.mxu0 0.0
    %1190 = vmatpush1.msra.mxu0 0.0
    %1191 = vmatprep.subr.mxu0 0.0
    %1192 = vmatpush1.msra.mxu0 0.0
    %1193 = vmatprep.subr.mxu0 0.0
    %1194 = vmatpush1.msra.mxu0 0.0
    %1195 = vmatprep.subr.mxu0 0.0
    %1196 = vmatpush1.msra.mxu0 0.0
    %1197 = vmatprep.subr.mxu0 0.0
    %1198 = vmatpush1.msra.mxu0 0.0
    %1199 = vmatprep.subr.mxu0 0.0
    %1200 = vmatpush1.msra.mxu0 0.0
    %1201 = vmatprep.subr.mxu0 0.0
    %1202 = vmatpush1.msra.mxu0 0.0
    %1203 = vmatprep.subr.mxu0 0.0
    %1204 = vmatpush1.msra.mxu0 0.0
    %1205 = vmatprep.subr.mxu0 0.0
    %1206 = vmatpush1.msra.mxu0 0.0
    %1207 = vmatprep.subr.mxu0 0.0
    %1208 = vmatpush1.msra.mxu0 0.0
    %1209 = vmatprep.subr.mxu0 0.0
    %1210 = vmatpush1.msra.mxu0 0.0
    %1211 = vmatprep.subr.mxu0 0.0
    %1212 = vmatpush1.msra.mxu0 0.0
    %1213 = vmatprep.subr.mxu0 0.0
    %1214 = vmatpush1.msra.mxu0 0.0
    %1215 = vmatprep.subr.mxu0 0.0
    %1216 = vmatpush1.msra.mxu0 0.0
    %1217 = vmatprep.subr.mxu0 0.0
    %1218 = vmatpush1.msra.mxu0 0.0
    %1219 = vmatprep.subr.mxu0 0.0
    %1220 = vmatpush1.msra.mxu0 0.0
    %1221 = vmatprep.subr.mxu0 0.0
    %1222 = vmatpush1.msra.mxu0 0.0
    %1223 = vmatprep.subr.mxu0 0.0
    %1224 = vmatpush1.msra.mxu0 0.0
    %1225 = vmatprep.subr.mxu0 0.0
    %1226 = vmatpush1.msra.mxu0 0.0
    %1227 = vmatprep.mubr.f32.mxu0 0.0
    %1228 = vmatmul.mubr.f32.gmra.mrb[0].mxu0 %v1158
    %v1229 = vpop.f32.mrb[0].mxu0
    %v1230 = vadd.f32 0.0, %v1229
    %v1231 = vpop.f32.mrb[0].mxu0
    %v1232 = vadd.f32 0.0, %v1231
    %1233 = vmatprep.mubr.f32.mxu0 0.0
    %1234 = vmatmul.mubr.f32.gmra.mrb[0].mxu0 %v1161
    %v1235 = vpop.f32.mrb[0].mxu0
    %v1236 = vadd.f32 0.0, %v1235
    %v1237 = vpop.f32.mrb[0].mxu0
    %v1238 = vadd.f32 0.0, %v1237
    %1239 = vdwg.mxu0
    %1240 = vmatprep.subr.mxu0 %v1150
    %1241 = vmatpush1.msra.mxu0 %v1149
    %1242 = vmatprep.subr.mxu0 %v1154
    %1243 = vmatpush1.msra.mxu0 %v1153
    %1244 = vmatprep.subr.mxu0 0.0
    %1245 = vmatpush1.msra.mxu0 0.0
    %1246 = vmatprep.subr.mxu0 0.0
    %1247 = vmatpush1.msra.mxu0 0.0
    %1248 = vmatprep.subr.mxu0 0.0
    %1249 = vmatpush1.msra.mxu0 0.0
    %1250 = vmatprep.subr.mxu0 0.0
    %1251 = vmatpush1.msra.mxu0 0.0
    %1252 = vmatprep.subr.mxu0 0.0
    %1253 = vmatpush1.msra.mxu0 0.0
    %1254 = vmatprep.subr.mxu0 0.0
    %1255 = vmatpush1.msra.mxu0 0.0
    %1256 = vmatprep.subr.mxu0 0.0
    %1257 = vmatpush1.msra.mxu0 0.0
    %1258 = vmatprep.subr.mxu0 0.0
    %1259 = vmatpush1.msra.mxu0 0.0
    %1260 = vmatprep.subr.mxu0 0.0
    %1261 = vmatpush1.msra.mxu0 0.0
    %1262 = vmatprep.subr.mxu0 0.0
    %1263 = vmatpush1.msra.mxu0 0.0
    %1264 = vmatprep.subr.mxu0 0.0
    %1265 = vmatpush1.msra.mxu0 0.0
    %1266 = vmatprep.subr.mxu0 0.0
    %1267 = vmatpush1.msra.mxu0 0.0
    %1268 = vmatprep.subr.mxu0 0.0
    %1269 = vmatpush1.msra.mxu0 0.0
    %1270 = vmatprep.subr.mxu0 0.0
    %1271 = vmatpush1.msra.mxu0 0.0
    %1272 = vmatprep.subr.mxu0 0.0
    %1273 = vmatpush1.msra.mxu0 0.0
    %1274 = vmatprep.subr.mxu0 0.0
    %1275 = vmatpush1.msra.mxu0 0.0
    %1276 = vmatprep.subr.mxu0 0.0
    %1277 = vmatpush1.msra.mxu0 0.0
    %1278 = vmatprep.subr.mxu0 0.0
    %1279 = vmatpush1.msra.mxu0 0.0
    %1280 = vmatprep.subr.mxu0 0.0
    %1281 = vmatpush1.msra.mxu0 0.0
    %1282 = vmatprep.subr.mxu0 0.0
    %1283 = vmatpush1.msra.mxu0 0.0
    %1284 = vmatprep.subr.mxu0 0.0
    %1285 = vmatpush1.msra.mxu0 0.0
    %1286 = vmatprep.subr.mxu0 0.0
    %1287 = vmatpush1.msra.mxu0 0.0
    %1288 = vmatprep.subr.mxu0 0.0
    %1289 = vmatpush1.msra.mxu0 0.0
    %1290 = vmatprep.subr.mxu0 0.0
    %1291 = vmatpush1.msra.mxu0 0.0
    %1292 = vmatprep.subr.mxu0 0.0
    %1293 = vmatpush1.msra.mxu0 0.0
    %1294 = vmatprep.subr.mxu0 0.0
    %1295 = vmatpush1.msra.mxu0 0.0
    %1296 = vmatprep.subr.mxu0 0.0
    %1297 = vmatpush1.msra.mxu0 0.0
    %1298 = vmatprep.subr.mxu0 0.0
    %1299 = vmatpush1.msra.mxu0 0.0
    %1300 = vmatprep.subr.mxu0 0.0
    %1301 = vmatpush1.msra.mxu0 0.0
    %1302 = vmatprep.subr.mxu0 0.0
    %1303 = vmatpush1.msra.mxu0 0.0
    %1304 = vmatprep.mubr.f32.mxu0 0.0
    %1305 = vmatmul.mubr.f32.gmra.mrb[0].mxu0 %v1158
    %v1306 = vpop.f32.mrb[0].mxu0
    %v1307 = vadd.f32 0.0, %v1306
    %v1308 = vpop.f32.mrb[0].mxu0
    %v1309 = vadd.f32 0.0, %v1308
    %1310 = vmatprep.mubr.f32.mxu0 0.0
    %1311 = vmatmul.mubr.f32.gmra.mrb[0].mxu0 %v1161
    %v1312 = vpop.f32.mrb[0].mxu0
    %v1313 = vadd.f32 0.0, %v1312
    %v1314 = vpop.f32.mrb[0].mxu0
    %v1315 = vadd.f32 0.0, %v1314
    %1316 = vdwg.mxu0
    %v1317 = vadd.f32 %v1230, %v1232
    %v1318 = vadd.f32 %v1317, %v1307
    %v1319 = vadd.f32 %v1318, %v1309
    %1320 = vadd.xlane.f32.xlu0 %v1319
    %v1321 = vpop.xlane.xlu0 %1320
    %v1322 = vadd.f32 %v1236, %v1238
    %v1323 = vadd.f32 %v1322, %v1313
    %v1324 = vadd.f32 %v1323, %v1315
    %1325 = vadd.xlane.f32.xlu0 %v1324
    %v1326 = vpop.xlane.xlu0 %1325
    %v1327 = vmul.f32 %v1230, %v1230
    %v1328 = vmul.f32 %v1232, %v1232
    %v1329 = vmul.f32 %v1307, %v1307
    %v1330 = vmul.f32 %v1309, %v1309
    %v1331 = vmul.f32 %v1236, %v1236
    %v1332 = vmul.f32 %v1238, %v1238
    %v1333 = vmul.f32 %v1313, %v1313
    %v1334 = vmul.f32 %v1315, %v1315
    %v1335 = vadd.f32 %v1327, %v1328
    %v1336 = vadd.f32 %v1335, %v1329
    %v1337 = vadd.f32 %v1336, %v1330
    %1338 = vadd.xlane.f32.xlu0 %v1337
    %v1339 = vpop.xlane.xlu0 %1338
    %v1340 = vadd.f32 %v1331, %v1332
    %v1341 = vadd.f32 %v1340, %v1333
    %v1342 = vadd.f32 %v1341, %v1334
    %1343 = vadd.xlane.f32.xlu0 %v1342
    %v1344 = vpop.xlane.xlu0 %1343
    %v1345 = vmul.f32 %v1321, %v237
    %v1346 = vmul.f32 %v1326, %v237
    %v1347 = vmul.f32 %v1339, %v237
    %v1348 = vmul.f32 %v1344, %v237
    %v1349 = vmul.f32 %v1345, %v1345
    %v1350 = vmul.f32 %v1346, %v1346
    %v1351 = vsub.f32 %v1347, %v1349
    %v1352 = vsub.f32 %v1348, %v1350
    %v1353 = vld [vmem:[%s10] sm:$0xff]
    %v1354 = vld [vmem:[%s10 + $0x8] sm:$0xff]
    %v1355 = vadd.f32 %v1351, 1e-05
    %v1356 = vadd.f32 %v1352, 1e-05
    %v1357 = vrsqrt.pop %v1355
    %v1358 = vrsqrt.pop %v1356
    %v1359 = vmul.f32 %v1353, %v1357
    %v1360 = vmul.f32 %v1354, %v1358
    %v1361 = vld [vmem:[%s11] sm:$0xff]
    %v1362 = vld [vmem:[%s11 + $0x8] sm:$0xff]
    %v1363 = vmul.f32 %v1345, %v1359
    %v1364 = vmul.f32 %v1346, %v1360
    %v1365 = vsub.f32 %v1361, %v1363
    %v1366 = vsub.f32 %v1362, %v1364
    %1368 = vset.pattern.permute.xlu0 0
    %1369 = vperm.xlu0 %1368, %v1359
    %v1370 = vpop.permute.xlu0 %1369
    %1373 = vset.pattern.permute.xlu0 0
    %1374 = vperm.xlu0 %1373, %v1360
    %v1375 = vpop.permute.xlu0 %1374
    %v1377 = vmul.f32 %v1230, %v1370
    %v1378 = vmul.f32 %v1232, %v1370
    %v1379 = vmul.f32 %v1307, %v1370
    %v1380 = vmul.f32 %v1309, %v1370
    %v1381 = vmul.f32 %v1236, %v1375
    %v1382 = vmul.f32 %v1238, %v1375
    %v1383 = vmul.f32 %v1313, %v1375
    %v1384 = vmul.f32 %v1315, %v1375
    %1386 = vset.pattern.permute.xlu0 0
    %1387 = vperm.xlu0 %1386, %v1365
    %v1388 = vpop.permute.xlu0 %1387
    %1391 = vset.pattern.permute.xlu0 0
    %1392 = vperm.xlu0 %1391, %v1366
    %v1393 = vpop.permute.xlu0 %1392
    %v1395 = vadd.f32 %v1377, %v1388
    %v1396 = vadd.f32 %v1378, %v1388
    %v1397 = vadd.f32 %v1379, %v1388
    %v1398 = vadd.f32 %v1380, %v1388
    %v1399 = vadd.f32 %v1381, %v1393
    %v1400 = vadd.f32 %v1382, %v1393
    %v1401 = vadd.f32 %v1383, %v1393
    %v1402 = vadd.f32 %v1384, %v1393
    %v1403 = vmax.f32 %v1395, 0.0
    %v1404 = vmax.f32 %v1396, 0.0
    %v1405 = vmax.f32 %v1397, 0.0
    %v1406 = vmax.f32 %v1398, 0.0
    %v1407 = vmax.f32 %v1399, 0.0
    %v1408 = vmax.f32 %v1400, 0.0
    %v1409 = vmax.f32 %v1401, 0.0
    %v1410 = vmax.f32 %v1402, 0.0
    %1411 = vst [vmem:[#allocation3] sm:$0xff] %v1403
    %1412 = vst [vmem:[#allocation3 + $0x8] sm:$0xff] %v1404
    %1413 = vst [vmem:[#allocation3 + $0x10] sm:$0xff] %v1405
    %1414 = vst [vmem:[#allocation3 + $0x18] sm:$0xff] %v1406
    %1415 = vst [vmem:[#allocation3 + $0x20] sm:$0xff] %v1407
    %1416 = vst [vmem:[#allocation3 + $0x28] sm:$0xff] %v1408
    %1417 = vst [vmem:[#allocation3 + $0x30] sm:$0xff] %v1409
    %1418 = vst [vmem:[#allocation3 + $0x38] sm:$0xff] %v1410
    // Predicated region
    $region50: #{tpu_custom_call.1} parent=1 // pred_check
      _
    $region51: #{tpu_custom_call.1} parent=1 // pred_check_branch
      %1420 = sbr.rel (0) target = $region53
    $region52: #{tpu_custom_call.1} parent=1 // pred_region
      %s1422 = ssub.s32 1024, 1024
      %1423 = vsyncadd [#allocation4], %s1422
      %s1424 = sshll.u32 [#allocation3], 4
      %s1425 = int_to_ptr.vmem [resolvable:$true] %s1424
      %1430 = dma.vmem_to_hbm [thread:$0]  %s1425, 1024, %s12, [#allocation4], 512, 512, 32
    $region53: #{tpu_custom_call.1} parent=1 // pred_fallthru
      _
    // Predicated region
    $region54: #{tpu_custom_call.1} parent=1 // pred_check
      _
    $region55: #{tpu_custom_call.1} parent=1 // pred_check_branch
      %1432 = sbr.rel (0) target = $region57
    $region56: #{tpu_custom_call.1} parent=1 // pred_region
      %1433 = dma.done [#allocation4], 1024
    $region57: #{tpu_custom_call.1} parent=1 // pred_fallthru
      _
    %1434 = vsyncpa [#allocation4], 1

</llo_original>
